<compile_context>
chip_gen: v5e
topology: v5e:2x2
jax: 0.10.0
libtpu: 0.0.40
codegen_flags: <defaults>
</compile_context>

<pallas_src>
import jax
import jax.numpy as jnp
from jax.experimental import pallas as pl
from jax.experimental.pallas import tpu as pltpu


def _round_up(x, m):
    return (x + m - 1) // m * m


def lstm_fc_kernel(x_ref, h0_ref, c0_ref, wih_t_ref, whh_t_ref, b_ref,
                   wfc_t_ref, bfc_ref,
                   logits_ref, hout_ref, cout_ref):
    """Hoisted input projection + unrolled LSTM recurrence + final FC.

    x_ref:     (T*Bp, Hp)   embedded inputs, time-major, flattened, bf16
    h0_ref:    (Bp, Hp)     initial hidden, f32
    c0_ref:    (Bp, Hp)     initial cell,   f32
    wih_t_ref: (Hp, 4*Hp)   pre-transposed, gate-block-padded W_ih, bf16
    whh_t_ref: (Hp, 4*Hp)   pre-transposed, gate-block-padded W_hh, bf16
    b_ref:     (1, 4*Hp)    combined bias (b_ih + b_hh), gate-block-padded, f32
    wfc_t_ref: (Hp, Vp)     pre-transposed FC weight, bf16
    bfc_ref:   (1, Vp)      FC bias, f32
    logits_ref:(Bp, Vp)     fc(h_T)
    hout_ref:  (Bp, Hp)     h_n
    cout_ref:  (Bp, Hp)     c_n
    """
    B, H = h0_ref.shape
    T = x_ref.shape[0] // B

    # --- Hoisted input projection: one big bf16 MXU matmul, f32 accumulation.
    # Bias is added once here instead of per timestep.
    x_proj = (jnp.dot(x_ref[...], wih_t_ref[...],
                      preferred_element_type=jnp.float32)
              + b_ref[...])                                   # (T*B, 4H) f32

    whh_t = whh_t_ref[...]                                    # (H, 4H) bf16
    h = h0_ref[...]                                           # f32
    c = c0_ref[...]                                           # f32

    # --- Fully unrolled recurrence (T is static and small): only the
    # hidden-state matmul is data-dependent across steps.
    for t in range(T):
        gates = (x_proj[t * B:(t + 1) * B]
                 + jnp.dot(h.astype(whh_t.dtype), whh_t,
                           preferred_element_type=jnp.float32))   # (B, 4H) f32
        # H is a multiple of 128 -> each gate slice is a full lane tile.
        i = jax.nn.sigmoid(gates[:, 0 * H:1 * H])
        f = jax.nn.sigmoid(gates[:, 1 * H:2 * H])
        g = jnp.tanh(gates[:, 2 * H:3 * H])
        o = jax.nn.sigmoid(gates[:, 3 * H:4 * H])
        c = f * c + i * g
        h = o * jnp.tanh(c)

    hout_ref[...] = h
    cout_ref[...] = c
    logits_ref[...] = (jnp.dot(h.astype(wfc_t_ref.dtype), wfc_t_ref[...],
                               preferred_element_type=jnp.float32)
                       + bfc_ref[...])


def init_params(key, vocab_size, hidden_size):
    ks = jax.random.split(key, 7)
    scale = 1.0 / jnp.sqrt(hidden_size)
    return {
        "embedding": jax.random.normal(ks[0], (vocab_size, hidden_size),
                                       jnp.float32),
        "w_ih": jax.random.uniform(ks[1], (4 * hidden_size, hidden_size),
                                   jnp.float32, -scale, scale),
        "w_hh": jax.random.uniform(ks[2], (4 * hidden_size, hidden_size),
                                   jnp.float32, -scale, scale),
        "b_ih": jax.random.uniform(ks[3], (4 * hidden_size,),
                                   jnp.float32, -scale, scale),
        "b_hh": jax.random.uniform(ks[4], (4 * hidden_size,),
                                   jnp.float32, -scale, scale),
        "w_fc": jax.random.uniform(ks[5], (vocab_size, hidden_size),
                                   jnp.float32, -scale, scale),
        "b_fc": jax.random.uniform(ks[6], (vocab_size,),
                                   jnp.float32, -scale, scale),
    }


def lstm_poetry_forward(x_ids, hidden, params):
    """Equivalent of LSTMPoetryGenerator.forward.

    x_ids:  int32 [B, T] token ids
    hidden: (h0, c0), each float32 [1, B, H]
    returns (logits [B, V], (h_n [1,B,H], c_n [1,B,H]))
    """
    h0, c0 = hidden
    B, T = x_ids.shape
    V, H = params["embedding"].shape

    B_pad = _round_up(B, 8)      # sublane alignment
    H_pad = _round_up(H, 128)    # lane alignment -> lane-aligned gate slices
    V_pad = _round_up(V, 128)    # lane-dense logits store

    # Embedding lookup (XLA gather) -> time-major -> bf16 -> pad -> flatten.
    emb = jnp.take(params["embedding"], x_ids, axis=0)             # (B, T, H)
    x_tbh = jnp.transpose(emb, (1, 0, 2)).astype(jnp.bfloat16)     # (T, B, H)
    x_p = jnp.pad(x_tbh, ((0, 0), (0, B_pad - B), (0, H_pad - H)))
    x_flat = x_p.reshape(T * B_pad, H_pad)

    # Pre-transpose + pad weights per gate block so each gate occupies its own
    # lane-aligned H_pad-wide column block; padded gates see zero weights and
    # zero bias, so padded hidden/cell lanes stay exactly zero over time.
    def pack_gate_weight(w):                     # (4H, H) -> (H_pad, 4*H_pad)
        w4 = jnp.transpose(w.reshape(4, H, H), (0, 2, 1))       # (gate,in,out)
        w4 = jnp.pad(w4, ((0, 0), (0, H_pad - H), (0, H_pad - H)))
        return jnp.transpose(w4, (1, 0, 2)).reshape(H_pad, 4 * H_pad)

    def pack_gate_bias(b):                       # (4H,) -> (1, 4*H_pad)
        return jnp.pad(b.reshape(4, H),
                       ((0, 0), (0, H_pad - H))).reshape(1, 4 * H_pad)

    wih_t = pack_gate_weight(params["w_ih"]).astype(jnp.bfloat16)
    whh_t = pack_gate_weight(params["w_hh"]).astype(jnp.bfloat16)
    b_comb = pack_gate_bias(params["b_ih"] + params["b_hh"]).astype(jnp.float32)

    wfc_t = jnp.pad(params["w_fc"].T,
                    ((0, H_pad - H), (0, V_pad - V))).astype(jnp.bfloat16)
    b_fc = jnp.pad(params["b_fc"],
                   (0, V_pad - V)).reshape(1, V_pad).astype(jnp.float32)

    h0_p = jnp.pad(h0[0].astype(jnp.float32),
                   ((0, B_pad - B), (0, H_pad - H)))
    c0_p = jnp.pad(c0[0].astype(jnp.float32),
                   ((0, B_pad - B), (0, H_pad - H)))

    vmem = pl.BlockSpec(memory_space=pltpu.MemorySpace.VMEM)
    out_shapes = (
        jax.ShapeDtypeStruct((B_pad, V_pad), jnp.float32),   # logits (padded)
        jax.ShapeDtypeStruct((B_pad, H_pad), jnp.float32),   # h_n   (padded)
        jax.ShapeDtypeStruct((B_pad, H_pad), jnp.float32),   # c_n   (padded)
    )

    # TODO(synk): at production shapes (H=300, V=char_size, long T), tile the
    # final FC over V with a grid (+ parallel dimension_semantics for v7x's
    # two TCs) and move T into the grid so x_t is double-buffered from HBM.
    logits_p, h_p, c_p = pl.pallas_call(
        lstm_fc_kernel,
        out_shape=out_shapes,
        in_specs=[vmem] * 8,
        out_specs=(vmem, vmem, vmem),
    )(x_flat, h0_p, c0_p, wih_t, whh_t, b_comb, wfc_t, b_fc)

    logits = logits_p[:B, :V]
    return logits, (h_p[:B, :H][None], c_p[:B, :H][None])


def init_hidden(batch_size, hidden_size):
    return (jnp.zeros((1, batch_size, hidden_size), jnp.float32),
            jnp.zeros((1, batch_size, hidden_size), jnp.float32))


def lstm_poetry_reference(x_ids, hidden, params):
    """Pure-JAX reference using the same bf16-weight / f32-accum precision."""
    h0, c0 = hidden
    B, T = x_ids.shape
    V, H = params["embedding"].shape
    emb = jnp.take(params["embedding"], x_ids, axis=0)           # (B, T, H)
    wih_t = params["w_ih"].T.astype(jnp.bfloat16)
    whh_t = params["w_hh"].T.astype(jnp.bfloat16)
    b = (params["b_ih"] + params["b_hh"]).astype(jnp.float32)
    h, c = h0[0], c0[0]
    for t in range(T):
        x_t = emb[:, t, :].astype(jnp.bfloat16)
        gates = (jnp.dot(x_t, wih_t, preferred_element_type=jnp.float32)
                 + jnp.dot(h.astype(jnp.bfloat16), whh_t,
                           preferred_element_type=jnp.float32) + b)
        i = jax.nn.sigmoid(gates[:, 0:H])
        f = jax.nn.sigmoid(gates[:, H:2 * H])
        g = jnp.tanh(gates[:, 2 * H:3 * H])
        o = jax.nn.sigmoid(gates[:, 3 * H:4 * H])
        c = f * c + i * g
        h = o * jnp.tanh(c)
    logits = (jnp.dot(h.astype(jnp.bfloat16),
                      params["w_fc"].T.astype(jnp.bfloat16),
                      preferred_element_type=jnp.float32) + params["b_fc"])
    return logits, (h[None], c[None])


if __name__ == "__main__":
    # Small shapes consistent with the module: vocab (char_size)=64, hidden=32.
    batch_size = 2
    seq_len = 8
    vocab_size = 64
    hidden_size = 32

    key = jax.random.PRNGKey(0)
    pkey, xkey = jax.random.split(key)
    params = init_params(pkey, vocab_size, hidden_size)

    x_ids = jax.random.randint(xkey, (batch_size, seq_len), 0, vocab_size,
                               dtype=jnp.int32)
    hidden = init_hidden(batch_size, hidden_size)

    fwd = jax.jit(lstm_poetry_forward)
    logits, (h_n, c_n) = fwd(x_ids, hidden, params)
    jax.block_until_ready((logits, h_n, c_n))

    assert logits.shape == (batch_size, vocab_size)
    assert h_n.shape == (1, batch_size, hidden_size)
    assert c_n.shape == (1, batch_size, hidden_size)

    # Correctness check against a pure-JAX reference (same precision policy).
    ref_logits, (ref_h, ref_c) = lstm_poetry_reference(x_ids, hidden, params)
    assert float(jnp.max(jnp.abs(logits - ref_logits))) < 2e-2
    assert float(jnp.max(jnp.abs(h_n - ref_h))) < 2e-2
    assert float(jnp.max(jnp.abs(c_n - ref_c))) < 2e-2

    print("KERNEL_OK")
</pallas_src>

<mosaic_0001>
module attributes {stable_mosaic.version = 11 : i64} {
  func.func @lstm_fc_kernel(%arg0: memref<64x128xbf16, #tpu.memory_space<vmem>>, %arg1: memref<8x128xf32, #tpu.memory_space<vmem>>, %arg2: memref<8x128xf32, #tpu.memory_space<vmem>>, %arg3: memref<128x512xbf16, #tpu.memory_space<vmem>>, %arg4: memref<128x512xbf16, #tpu.memory_space<vmem>>, %arg5: memref<1x512xf32, #tpu.memory_space<vmem>>, %arg6: memref<128x128xbf16, #tpu.memory_space<vmem>>, %arg7: memref<1x128xf32, #tpu.memory_space<vmem>>, %arg8: memref<8x128xf32, #tpu.memory_space<vmem>>, %arg9: memref<8x128xf32, #tpu.memory_space<vmem>>, %arg10: memref<8x128xf32, #tpu.memory_space<vmem>>) attributes {dimension_semantics = [], scalar_prefetch = 0 : i64, scratch_operands = 0 : i64, tpu.core_type = #tpu.core_type<tc>} {
    %c0 = arith.constant 0 : index
    %c0_0 = arith.constant 0 : index
    %0 = vector.load %arg0[%c0, %c0_0] : memref<64x128xbf16, #tpu.memory_space<vmem>>, vector<64x128xbf16>
    %c0_1 = arith.constant 0 : index
    %c0_2 = arith.constant 0 : index
    %1 = vector.load %arg3[%c0_1, %c0_2] : memref<128x512xbf16, #tpu.memory_space<vmem>>, vector<128x512xbf16>
    %cst = arith.constant dense<0.000000e+00> : vector<64x512xf32>
    %2 = tpu.matmul %0, %1, %cst {dimension_numbers = #tpu.dot_dimension_numbers<[1], [0], [0], [1], [0, 0, 1, 1], [], []>} : vector<64x128xbf16>, vector<128x512xbf16>, vector<64x512xf32> -> vector<64x512xf32>
    %c0_3 = arith.constant 0 : index
    %c0_4 = arith.constant 0 : index
    %3 = vector.load %arg5[%c0_3, %c0_4] : memref<1x512xf32, #tpu.memory_space<vmem>>, vector<1x512xf32>
    %4 = vector.broadcast %3 : vector<1x512xf32> to vector<64x512xf32>
    %5 = arith.addf %2, %4 : vector<64x512xf32>
    %c0_5 = arith.constant 0 : index
    %c0_6 = arith.constant 0 : index
    %6 = vector.load %arg4[%c0_5, %c0_6] : memref<128x512xbf16, #tpu.memory_space<vmem>>, vector<128x512xbf16>
    %c0_7 = arith.constant 0 : index
    %c0_8 = arith.constant 0 : index
    %7 = vector.load %arg1[%c0_7, %c0_8] : memref<8x128xf32, #tpu.memory_space<vmem>>, vector<8x128xf32>
    %c0_9 = arith.constant 0 : index
    %c0_10 = arith.constant 0 : index
    %8 = vector.load %arg2[%c0_9, %c0_10] : memref<8x128xf32, #tpu.memory_space<vmem>>, vector<8x128xf32>
    %9 = vector.extract_strided_slice %5 {offsets = [0, 0], sizes = [8, 512], strides = [1, 1]} : vector<64x512xf32> to vector<8x512xf32>
    %10 = arith.truncf %7 : vector<8x128xf32> to vector<8x128xbf16>
    %cst_11 = arith.constant dense<0.000000e+00> : vector<8x512xf32>
    %11 = tpu.matmul %10, %6, %cst_11 {dimension_numbers = #tpu.dot_dimension_numbers<[1], [0], [0], [1], [0, 0, 1, 1], [], []>} : vector<8x128xbf16>, vector<128x512xbf16>, vector<8x512xf32> -> vector<8x512xf32>
    %12 = arith.addf %9, %11 : vector<8x512xf32>
    %13 = vector.extract_strided_slice %12 {offsets = [0, 0], sizes = [8, 128], strides = [1, 1]} : vector<8x512xf32> to vector<8x128xf32>
    %14 = arith.negf %13 : vector<8x128xf32>
    %15 = math.exp %14 : vector<8x128xf32>
    %cst_12 = arith.constant 1.000000e+00 : f32
    %16 = vector.broadcast %cst_12 : f32 to vector<8x128xf32>
    %17 = arith.addf %16, %15 : vector<8x128xf32>
    %18 = arith.divf %16, %17 : vector<8x128xf32>
    %19 = vector.extract_strided_slice %12 {offsets = [0, 128], sizes = [8, 128], strides = [1, 1]} : vector<8x512xf32> to vector<8x128xf32>
    %20 = arith.negf %19 : vector<8x128xf32>
    %21 = math.exp %20 : vector<8x128xf32>
    %cst_13 = arith.constant 1.000000e+00 : f32
    %22 = vector.broadcast %cst_13 : f32 to vector<8x128xf32>
    %23 = arith.addf %22, %21 : vector<8x128xf32>
    %24 = arith.divf %22, %23 : vector<8x128xf32>
    %25 = vector.extract_strided_slice %12 {offsets = [0, 256], sizes = [8, 128], strides = [1, 1]} : vector<8x512xf32> to vector<8x128xf32>
    %26 = math.tanh %25 : vector<8x128xf32>
    %27 = vector.extract_strided_slice %12 {offsets = [0, 384], sizes = [8, 128], strides = [1, 1]} : vector<8x512xf32> to vector<8x128xf32>
    %28 = arith.negf %27 : vector<8x128xf32>
    %29 = math.exp %28 : vector<8x128xf32>
    %cst_14 = arith.constant 1.000000e+00 : f32
    %30 = vector.broadcast %cst_14 : f32 to vector<8x128xf32>
    %31 = arith.addf %30, %29 : vector<8x128xf32>
    %32 = arith.divf %30, %31 : vector<8x128xf32>
    %33 = arith.mulf %24, %8 : vector<8x128xf32>
    %34 = arith.mulf %18, %26 : vector<8x128xf32>
    %35 = arith.addf %33, %34 : vector<8x128xf32>
    %36 = math.tanh %35 : vector<8x128xf32>
    %37 = arith.mulf %32, %36 : vector<8x128xf32>
    %38 = vector.extract_strided_slice %5 {offsets = [8, 0], sizes = [8, 512], strides = [1, 1]} : vector<64x512xf32> to vector<8x512xf32>
    %39 = arith.truncf %37 : vector<8x128xf32> to vector<8x128xbf16>
    %cst_15 = arith.constant dense<0.000000e+00> : vector<8x512xf32>
    %40 = tpu.matmul %39, %6, %cst_15 {dimension_numbers = #tpu.dot_dimension_numbers<[1], [0], [0], [1], [0, 0, 1, 1], [], []>} : vector<8x128xbf16>, vector<128x512xbf16>, vector<8x512xf32> -> vector<8x512xf32>
    %41 = arith.addf %38, %40 : vector<8x512xf32>
    %42 = vector.extract_strided_slice %41 {offsets = [0, 0], sizes = [8, 128], strides = [1, 1]} : vector<8x512xf32> to vector<8x128xf32>
    %43 = arith.negf %42 : vector<8x128xf32>
    %44 = math.exp %43 : vector<8x128xf32>
    %cst_16 = arith.constant 1.000000e+00 : f32
    %45 = vector.broadcast %cst_16 : f32 to vector<8x128xf32>
    %46 = arith.addf %45, %44 : vector<8x128xf32>
    %47 = arith.divf %45, %46 : vector<8x128xf32>
    %48 = vector.extract_strided_slice %41 {offsets = [0, 128], sizes = [8, 128], strides = [1, 1]} : vector<8x512xf32> to vector<8x128xf32>
    %49 = arith.negf %48 : vector<8x128xf32>
    %50 = math.exp %49 : vector<8x128xf32>
    %cst_17 = arith.constant 1.000000e+00 : f32
    %51 = vector.broadcast %cst_17 : f32 to vector<8x128xf32>
    %52 = arith.addf %51, %50 : vector<8x128xf32>
    %53 = arith.divf %51, %52 : vector<8x128xf32>
    %54 = vector.extract_strided_slice %41 {offsets = [0, 256], sizes = [8, 128], strides = [1, 1]} : vector<8x512xf32> to vector<8x128xf32>
    %55 = math.tanh %54 : vector<8x128xf32>
    %56 = vector.extract_strided_slice %41 {offsets = [0, 384], sizes = [8, 128], strides = [1, 1]} : vector<8x512xf32> to vector<8x128xf32>
    %57 = arith.negf %56 : vector<8x128xf32>
    %58 = math.exp %57 : vector<8x128xf32>
    %cst_18 = arith.constant 1.000000e+00 : f32
    %59 = vector.broadcast %cst_18 : f32 to vector<8x128xf32>
    %60 = arith.addf %59, %58 : vector<8x128xf32>
    %61 = arith.divf %59, %60 : vector<8x128xf32>
    %62 = arith.mulf %53, %35 : vector<8x128xf32>
    %63 = arith.mulf %47, %55 : vector<8x128xf32>
    %64 = arith.addf %62, %63 : vector<8x128xf32>
    %65 = math.tanh %64 : vector<8x128xf32>
    %66 = arith.mulf %61, %65 : vector<8x128xf32>
    %67 = vector.extract_strided_slice %5 {offsets = [16, 0], sizes = [8, 512], strides = [1, 1]} : vector<64x512xf32> to vector<8x512xf32>
    %68 = arith.truncf %66 : vector<8x128xf32> to vector<8x128xbf16>
    %cst_19 = arith.constant dense<0.000000e+00> : vector<8x512xf32>
    %69 = tpu.matmul %68, %6, %cst_19 {dimension_numbers = #tpu.dot_dimension_numbers<[1], [0], [0], [1], [0, 0, 1, 1], [], []>} : vector<8x128xbf16>, vector<128x512xbf16>, vector<8x512xf32> -> vector<8x512xf32>
    %70 = arith.addf %67, %69 : vector<8x512xf32>
    %71 = vector.extract_strided_slice %70 {offsets = [0, 0], sizes = [8, 128], strides = [1, 1]} : vector<8x512xf32> to vector<8x128xf32>
    %72 = arith.negf %71 : vector<8x128xf32>
    %73 = math.exp %72 : vector<8x128xf32>
    %cst_20 = arith.constant 1.000000e+00 : f32
    %74 = vector.broadcast %cst_20 : f32 to vector<8x128xf32>
    %75 = arith.addf %74, %73 : vector<8x128xf32>
    %76 = arith.divf %74, %75 : vector<8x128xf32>
    %77 = vector.extract_strided_slice %70 {offsets = [0, 128], sizes = [8, 128], strides = [1, 1]} : vector<8x512xf32> to vector<8x128xf32>
    %78 = arith.negf %77 : vector<8x128xf32>
    %79 = math.exp %78 : vector<8x128xf32>
    %cst_21 = arith.constant 1.000000e+00 : f32
    %80 = vector.broadcast %cst_21 : f32 to vector<8x128xf32>
    %81 = arith.addf %80, %79 : vector<8x128xf32>
    %82 = arith.divf %80, %81 : vector<8x128xf32>
    %83 = vector.extract_strided_slice %70 {offsets = [0, 256], sizes = [8, 128], strides = [1, 1]} : vector<8x512xf32> to vector<8x128xf32>
    %84 = math.tanh %83 : vector<8x128xf32>
    %85 = vector.extract_strided_slice %70 {offsets = [0, 384], sizes = [8, 128], strides = [1, 1]} : vector<8x512xf32> to vector<8x128xf32>
    %86 = arith.negf %85 : vector<8x128xf32>
    %87 = math.exp %86 : vector<8x128xf32>
    %cst_22 = arith.constant 1.000000e+00 : f32
    %88 = vector.broadcast %cst_22 : f32 to vector<8x128xf32>
    %89 = arith.addf %88, %87 : vector<8x128xf32>
    %90 = arith.divf %88, %89 : vector<8x128xf32>
    %91 = arith.mulf %82, %64 : vector<8x128xf32>
    %92 = arith.mulf %76, %84 : vector<8x128xf32>
    %93 = arith.addf %91, %92 : vector<8x128xf32>
    %94 = math.tanh %93 : vector<8x128xf32>
    %95 = arith.mulf %90, %94 : vector<8x128xf32>
    %96 = vector.extract_strided_slice %5 {offsets = [24, 0], sizes = [8, 512], strides = [1, 1]} : vector<64x512xf32> to vector<8x512xf32>
    %97 = arith.truncf %95 : vector<8x128xf32> to vector<8x128xbf16>
    %cst_23 = arith.constant dense<0.000000e+00> : vector<8x512xf32>
    %98 = tpu.matmul %97, %6, %cst_23 {dimension_numbers = #tpu.dot_dimension_numbers<[1], [0], [0], [1], [0, 0, 1, 1], [], []>} : vector<8x128xbf16>, vector<128x512xbf16>, vector<8x512xf32> -> vector<8x512xf32>
    %99 = arith.addf %96, %98 : vector<8x512xf32>
    %100 = vector.extract_strided_slice %99 {offsets = [0, 0], sizes = [8, 128], strides = [1, 1]} : vector<8x512xf32> to vector<8x128xf32>
    %101 = arith.negf %100 : vector<8x128xf32>
    %102 = math.exp %101 : vector<8x128xf32>
    %cst_24 = arith.constant 1.000000e+00 : f32
    %103 = vector.broadcast %cst_24 : f32 to vector<8x128xf32>
    %104 = arith.addf %103, %102 : vector<8x128xf32>
    %105 = arith.divf %103, %104 : vector<8x128xf32>
    %106 = vector.extract_strided_slice %99 {offsets = [0, 128], sizes = [8, 128], strides = [1, 1]} : vector<8x512xf32> to vector<8x128xf32>
    %107 = arith.negf %106 : vector<8x128xf32>
    %108 = math.exp %107 : vector<8x128xf32>
    %cst_25 = arith.constant 1.000000e+00 : f32
    %109 = vector.broadcast %cst_25 : f32 to vector<8x128xf32>
    %110 = arith.addf %109, %108 : vector<8x128xf32>
    %111 = arith.divf %109, %110 : vector<8x128xf32>
    %112 = vector.extract_strided_slice %99 {offsets = [0, 256], sizes = [8, 128], strides = [1, 1]} : vector<8x512xf32> to vector<8x128xf32>
    %113 = math.tanh %112 : vector<8x128xf32>
    %114 = vector.extract_strided_slice %99 {offsets = [0, 384], sizes = [8, 128], strides = [1, 1]} : vector<8x512xf32> to vector<8x128xf32>
    %115 = arith.negf %114 : vector<8x128xf32>
    %116 = math.exp %115 : vector<8x128xf32>
    %cst_26 = arith.constant 1.000000e+00 : f32
    %117 = vector.broadcast %cst_26 : f32 to vector<8x128xf32>
    %118 = arith.addf %117, %116 : vector<8x128xf32>
    %119 = arith.divf %117, %118 : vector<8x128xf32>
    %120 = arith.mulf %111, %93 : vector<8x128xf32>
    %121 = arith.mulf %105, %113 : vector<8x128xf32>
    %122 = arith.addf %120, %121 : vector<8x128xf32>
    %123 = math.tanh %122 : vector<8x128xf32>
    %124 = arith.mulf %119, %123 : vector<8x128xf32>
    %125 = vector.extract_strided_slice %5 {offsets = [32, 0], sizes = [8, 512], strides = [1, 1]} : vector<64x512xf32> to vector<8x512xf32>
    %126 = arith.truncf %124 : vector<8x128xf32> to vector<8x128xbf16>
    %cst_27 = arith.constant dense<0.000000e+00> : vector<8x512xf32>
    %127 = tpu.matmul %126, %6, %cst_27 {dimension_numbers = #tpu.dot_dimension_numbers<[1], [0], [0], [1], [0, 0, 1, 1], [], []>} : vector<8x128xbf16>, vector<128x512xbf16>, vector<8x512xf32> -> vector<8x512xf32>
    %128 = arith.addf %125, %127 : vector<8x512xf32>
    %129 = vector.extract_strided_slice %128 {offsets = [0, 0], sizes = [8, 128], strides = [1, 1]} : vector<8x512xf32> to vector<8x128xf32>
    %130 = arith.negf %129 : vector<8x128xf32>
    %131 = math.exp %130 : vector<8x128xf32>
    %cst_28 = arith.constant 1.000000e+00 : f32
    %132 = vector.broadcast %cst_28 : f32 to vector<8x128xf32>
    %133 = arith.addf %132, %131 : vector<8x128xf32>
    %134 = arith.divf %132, %133 : vector<8x128xf32>
    %135 = vector.extract_strided_slice %128 {offsets = [0, 128], sizes = [8, 128], strides = [1, 1]} : vector<8x512xf32> to vector<8x128xf32>
    %136 = arith.negf %135 : vector<8x128xf32>
    %137 = math.exp %136 : vector<8x128xf32>
    %cst_29 = arith.constant 1.000000e+00 : f32
    %138 = vector.broadcast %cst_29 : f32 to vector<8x128xf32>
    %139 = arith.addf %138, %137 : vector<8x128xf32>
    %140 = arith.divf %138, %139 : vector<8x128xf32>
    %141 = vector.extract_strided_slice %128 {offsets = [0, 256], sizes = [8, 128], strides = [1, 1]} : vector<8x512xf32> to vector<8x128xf32>
    %142 = math.tanh %141 : vector<8x128xf32>
    %143 = vector.extract_strided_slice %128 {offsets = [0, 384], sizes = [8, 128], strides = [1, 1]} : vector<8x512xf32> to vector<8x128xf32>
    %144 = arith.negf %143 : vector<8x128xf32>
    %145 = math.exp %144 : vector<8x128xf32>
    %cst_30 = arith.constant 1.000000e+00 : f32
    %146 = vector.broadcast %cst_30 : f32 to vector<8x128xf32>
    %147 = arith.addf %146, %145 : vector<8x128xf32>
    %148 = arith.divf %146, %147 : vector<8x128xf32>
    %149 = arith.mulf %140, %122 : vector<8x128xf32>
    %150 = arith.mulf %134, %142 : vector<8x128xf32>
    %151 = arith.addf %149, %150 : vector<8x128xf32>
    %152 = math.tanh %151 : vector<8x128xf32>
    %153 = arith.mulf %148, %152 : vector<8x128xf32>
    %154 = vector.extract_strided_slice %5 {offsets = [40, 0], sizes = [8, 512], strides = [1, 1]} : vector<64x512xf32> to vector<8x512xf32>
    %155 = arith.truncf %153 : vector<8x128xf32> to vector<8x128xbf16>
    %cst_31 = arith.constant dense<0.000000e+00> : vector<8x512xf32>
    %156 = tpu.matmul %155, %6, %cst_31 {dimension_numbers = #tpu.dot_dimension_numbers<[1], [0], [0], [1], [0, 0, 1, 1], [], []>} : vector<8x128xbf16>, vector<128x512xbf16>, vector<8x512xf32> -> vector<8x512xf32>
    %157 = arith.addf %154, %156 : vector<8x512xf32>
    %158 = vector.extract_strided_slice %157 {offsets = [0, 0], sizes = [8, 128], strides = [1, 1]} : vector<8x512xf32> to vector<8x128xf32>
    %159 = arith.negf %158 : vector<8x128xf32>
    %160 = math.exp %159 : vector<8x128xf32>
    %cst_32 = arith.constant 1.000000e+00 : f32
    %161 = vector.broadcast %cst_32 : f32 to vector<8x128xf32>
    %162 = arith.addf %161, %160 : vector<8x128xf32>
    %163 = arith.divf %161, %162 : vector<8x128xf32>
    %164 = vector.extract_strided_slice %157 {offsets = [0, 128], sizes = [8, 128], strides = [1, 1]} : vector<8x512xf32> to vector<8x128xf32>
    %165 = arith.negf %164 : vector<8x128xf32>
    %166 = math.exp %165 : vector<8x128xf32>
    %cst_33 = arith.constant 1.000000e+00 : f32
    %167 = vector.broadcast %cst_33 : f32 to vector<8x128xf32>
    %168 = arith.addf %167, %166 : vector<8x128xf32>
    %169 = arith.divf %167, %168 : vector<8x128xf32>
    %170 = vector.extract_strided_slice %157 {offsets = [0, 256], sizes = [8, 128], strides = [1, 1]} : vector<8x512xf32> to vector<8x128xf32>
    %171 = math.tanh %170 : vector<8x128xf32>
    %172 = vector.extract_strided_slice %157 {offsets = [0, 384], sizes = [8, 128], strides = [1, 1]} : vector<8x512xf32> to vector<8x128xf32>
    %173 = arith.negf %172 : vector<8x128xf32>
    %174 = math.exp %173 : vector<8x128xf32>
    %cst_34 = arith.constant 1.000000e+00 : f32
    %175 = vector.broadcast %cst_34 : f32 to vector<8x128xf32>
    %176 = arith.addf %175, %174 : vector<8x128xf32>
    %177 = arith.divf %175, %176 : vector<8x128xf32>
    %178 = arith.mulf %169, %151 : vector<8x128xf32>
    %179 = arith.mulf %163, %171 : vector<8x128xf32>
    %180 = arith.addf %178, %179 : vector<8x128xf32>
    %181 = math.tanh %180 : vector<8x128xf32>
    %182 = arith.mulf %177, %181 : vector<8x128xf32>
    %183 = vector.extract_strided_slice %5 {offsets = [48, 0], sizes = [8, 512], strides = [1, 1]} : vector<64x512xf32> to vector<8x512xf32>
    %184 = arith.truncf %182 : vector<8x128xf32> to vector<8x128xbf16>
    %cst_35 = arith.constant dense<0.000000e+00> : vector<8x512xf32>
    %185 = tpu.matmul %184, %6, %cst_35 {dimension_numbers = #tpu.dot_dimension_numbers<[1], [0], [0], [1], [0, 0, 1, 1], [], []>} : vector<8x128xbf16>, vector<128x512xbf16>, vector<8x512xf32> -> vector<8x512xf32>
    %186 = arith.addf %183, %185 : vector<8x512xf32>
    %187 = vector.extract_strided_slice %186 {offsets = [0, 0], sizes = [8, 128], strides = [1, 1]} : vector<8x512xf32> to vector<8x128xf32>
    %188 = arith.negf %187 : vector<8x128xf32>
    %189 = math.exp %188 : vector<8x128xf32>
    %cst_36 = arith.constant 1.000000e+00 : f32
    %190 = vector.broadcast %cst_36 : f32 to vector<8x128xf32>
    %191 = arith.addf %190, %189 : vector<8x128xf32>
    %192 = arith.divf %190, %191 : vector<8x128xf32>
    %193 = vector.extract_strided_slice %186 {offsets = [0, 128], sizes = [8, 128], strides = [1, 1]} : vector<8x512xf32> to vector<8x128xf32>
    %194 = arith.negf %193 : vector<8x128xf32>
    %195 = math.exp %194 : vector<8x128xf32>
    %cst_37 = arith.constant 1.000000e+00 : f32
    %196 = vector.broadcast %cst_37 : f32 to vector<8x128xf32>
    %197 = arith.addf %196, %195 : vector<8x128xf32>
    %198 = arith.divf %196, %197 : vector<8x128xf32>
    %199 = vector.extract_strided_slice %186 {offsets = [0, 256], sizes = [8, 128], strides = [1, 1]} : vector<8x512xf32> to vector<8x128xf32>
    %200 = math.tanh %199 : vector<8x128xf32>
    %201 = vector.extract_strided_slice %186 {offsets = [0, 384], sizes = [8, 128], strides = [1, 1]} : vector<8x512xf32> to vector<8x128xf32>
    %202 = arith.negf %201 : vector<8x128xf32>
    %203 = math.exp %202 : vector<8x128xf32>
    %cst_38 = arith.constant 1.000000e+00 : f32
    %204 = vector.broadcast %cst_38 : f32 to vector<8x128xf32>
    %205 = arith.addf %204, %203 : vector<8x128xf32>
    %206 = arith.divf %204, %205 : vector<8x128xf32>
    %207 = arith.mulf %198, %180 : vector<8x128xf32>
    %208 = arith.mulf %192, %200 : vector<8x128xf32>
    %209 = arith.addf %207, %208 : vector<8x128xf32>
    %210 = math.tanh %209 : vector<8x128xf32>
    %211 = arith.mulf %206, %210 : vector<8x128xf32>
    %212 = vector.extract_strided_slice %5 {offsets = [56, 0], sizes = [8, 512], strides = [1, 1]} : vector<64x512xf32> to vector<8x512xf32>
    %213 = arith.truncf %211 : vector<8x128xf32> to vector<8x128xbf16>
    %cst_39 = arith.constant dense<0.000000e+00> : vector<8x512xf32>
    %214 = tpu.matmul %213, %6, %cst_39 {dimension_numbers = #tpu.dot_dimension_numbers<[1], [0], [0], [1], [0, 0, 1, 1], [], []>} : vector<8x128xbf16>, vector<128x512xbf16>, vector<8x512xf32> -> vector<8x512xf32>
    %215 = arith.addf %212, %214 : vector<8x512xf32>
    %216 = vector.extract_strided_slice %215 {offsets = [0, 0], sizes = [8, 128], strides = [1, 1]} : vector<8x512xf32> to vector<8x128xf32>
    %217 = arith.negf %216 : vector<8x128xf32>
    %218 = math.exp %217 : vector<8x128xf32>
    %cst_40 = arith.constant 1.000000e+00 : f32
    %219 = vector.broadcast %cst_40 : f32 to vector<8x128xf32>
    %220 = arith.addf %219, %218 : vector<8x128xf32>
    %221 = arith.divf %219, %220 : vector<8x128xf32>
    %222 = vector.extract_strided_slice %215 {offsets = [0, 128], sizes = [8, 128], strides = [1, 1]} : vector<8x512xf32> to vector<8x128xf32>
    %223 = arith.negf %222 : vector<8x128xf32>
    %224 = math.exp %223 : vector<8x128xf32>
    %cst_41 = arith.constant 1.000000e+00 : f32
    %225 = vector.broadcast %cst_41 : f32 to vector<8x128xf32>
    %226 = arith.addf %225, %224 : vector<8x128xf32>
    %227 = arith.divf %225, %226 : vector<8x128xf32>
    %228 = vector.extract_strided_slice %215 {offsets = [0, 256], sizes = [8, 128], strides = [1, 1]} : vector<8x512xf32> to vector<8x128xf32>
    %229 = math.tanh %228 : vector<8x128xf32>
    %230 = vector.extract_strided_slice %215 {offsets = [0, 384], sizes = [8, 128], strides = [1, 1]} : vector<8x512xf32> to vector<8x128xf32>
    %231 = arith.negf %230 : vector<8x128xf32>
    %232 = math.exp %231 : vector<8x128xf32>
    %cst_42 = arith.constant 1.000000e+00 : f32
    %233 = vector.broadcast %cst_42 : f32 to vector<8x128xf32>
    %234 = arith.addf %233, %232 : vector<8x128xf32>
    %235 = arith.divf %233, %234 : vector<8x128xf32>
    %236 = arith.mulf %227, %209 : vector<8x128xf32>
    %237 = arith.mulf %221, %229 : vector<8x128xf32>
    %238 = arith.addf %236, %237 : vector<8x128xf32>
    %239 = math.tanh %238 : vector<8x128xf32>
    %240 = arith.mulf %235, %239 : vector<8x128xf32>
    %c0_43 = arith.constant 0 : index
    %c0_44 = arith.constant 0 : index
    %241 = vector.load %arg9[%c0_43, %c0_44] : memref<8x128xf32, #tpu.memory_space<vmem>>, vector<8x128xf32>
    tpu.vector_store %arg9[%c0_43, %c0_44], %240 {strides = array<i32>} : memref<8x128xf32, #tpu.memory_space<vmem>>, vector<8x128xf32>,
    %c0_45 = arith.constant 0 : index
    %c0_46 = arith.constant 0 : index
    %242 = vector.load %arg10[%c0_45, %c0_46] : memref<8x128xf32, #tpu.memory_space<vmem>>, vector<8x128xf32>
    tpu.vector_store %arg10[%c0_45, %c0_46], %238 {strides = array<i32>} : memref<8x128xf32, #tpu.memory_space<vmem>>, vector<8x128xf32>,
    %243 = arith.truncf %240 : vector<8x128xf32> to vector<8x128xbf16>
    %c0_47 = arith.constant 0 : index
    %c0_48 = arith.constant 0 : index
    %244 = vector.load %arg6[%c0_47, %c0_48] : memref<128x128xbf16, #tpu.memory_space<vmem>>, vector<128x128xbf16>
    %cst_49 = arith.constant dense<0.000000e+00> : vector<8x128xf32>
    %245 = tpu.matmul %243, %244, %cst_49 {dimension_numbers = #tpu.dot_dimension_numbers<[1], [0], [0], [1], [0, 0, 1, 1], [], []>} : vector<8x128xbf16>, vector<128x128xbf16>, vector<8x128xf32> -> vector<8x128xf32>
    %c0_50 = arith.constant 0 : index
    %c0_51 = arith.constant 0 : index
    %246 = vector.load %arg7[%c0_50, %c0_51] : memref<1x128xf32, #tpu.memory_space<vmem>>, vector<1x128xf32>
    %247 = vector.broadcast %246 : vector<1x128xf32> to vector<8x128xf32>
    %248 = arith.addf %245, %247 : vector<8x128xf32>
    %c0_52 = arith.constant 0 : index
    %c0_53 = arith.constant 0 : index
    %249 = vector.load %arg8[%c0_52, %c0_53] : memref<8x128xf32, #tpu.memory_space<vmem>>, vector<8x128xf32>
    tpu.vector_store %arg8[%c0_52, %c0_53], %248 {strides = array<i32>} : memref<8x128xf32, #tpu.memory_space<vmem>>, vector<8x128xf32>,
    return
  }
}

</mosaic_0001>

<llo_original>
// kernel: lstm_poetry_forward.1
$region0: #{lstm_poetry_forward.1}
  #allocation0 [shape = 'u32[]', space=smem, size = 0x4, offset = 0x4, fixed_abs, tag = 'smem constant byte address 0x4 - core index']
  #allocation1 [shape = 'u32[72,128]{1,0:T(1,128)}', space=vmem, size = 0x9000, scoped, tag = 'internal scratch']
  %s0 = inlined_call_operand.vmem [shape: bf16[64,128], index: 0, kind: input, shape index: {}]
  %s1 = inlined_call_operand.vmem [shape: f32[8,128], index: 1, kind: input, shape index: {}]
  %s2 = inlined_call_operand.vmem [shape: f32[8,128], index: 2, kind: input, shape index: {}]
  %s3 = inlined_call_operand.vmem [shape: bf16[128,512], index: 3, kind: input, shape index: {}]
  %s4 = inlined_call_operand.vmem [shape: bf16[128,512], index: 4, kind: input, shape index: {}]
  %s5 = inlined_call_operand.vmem [shape: f32[1,512], index: 5, kind: input, shape index: {}]
  %s6 = inlined_call_operand.vmem [shape: bf16[128,128], index: 6, kind: input, shape index: {}]
  %s7 = inlined_call_operand.vmem [shape: f32[1,128], index: 7, kind: input, shape index: {}]
  %s8 = inlined_call_operand.vmem [shape: f32[8,128], index: 8, kind: output, shape index: {0}]
  %s9 = inlined_call_operand.vmem [shape: f32[8,128], index: 9, kind: output, shape index: {1}]
  %s10 = inlined_call_operand.vmem [shape: f32[8,128], index: 10, kind: output, shape index: {2}]
  %11 = xla_tuple %s8, %s9, %s10
  %s12 = sld [smem:[#allocation0]]
  $region58: #{lstm_poetry_forward.1} parent=0
    _
  %s14 = ssub.s32 1, %s12
  %s15 = scalar_select 0, %s14, %s12
  // Predicated region
  $region2: #{lstm_poetry_forward.1} parent=0 // pred_check
    _
  $region3: #{lstm_poetry_forward.1} parent=0 // pred_check_branch
    %17 = sbr.rel (0) target = $region5
  $region4: #{lstm_poetry_forward.1} parent=0 // pred_region
    _
  $region5: #{lstm_poetry_forward.1} parent=0 // pred_fallthru
    _
  // Predicated region
  $region6: #{lstm_poetry_forward.1} parent=0 // pred_check
    _
  $region7: #{lstm_poetry_forward.1} parent=0 // pred_check_branch
    %19 = sbr.rel (0) target = $region9
  $region8: #{lstm_poetry_forward.1} parent=0 // pred_region
    _
  $region9: #{lstm_poetry_forward.1} parent=0 // pred_fallthru
    _
  // Predicated region
  $region10: #{lstm_poetry_forward.1} parent=0 // pred_check
    _
  $region11: #{lstm_poetry_forward.1} parent=0 // pred_check_branch
    %21 = sbr.rel (0) target = $region13
  $region12: #{lstm_poetry_forward.1} parent=0 // pred_region
    _
  $region13: #{lstm_poetry_forward.1} parent=0 // pred_fallthru
    _
  // Predicated region
  $region14: #{lstm_poetry_forward.1} parent=0 // pred_check
    _
  $region15: #{lstm_poetry_forward.1} parent=0 // pred_check_branch
    %23 = sbr.rel (0) target = $region17
  $region16: #{lstm_poetry_forward.1} parent=0 // pred_region
    _
  $region17: #{lstm_poetry_forward.1} parent=0 // pred_fallthru
    _
  // Predicated region
  $region18: #{lstm_poetry_forward.1} parent=0 // pred_check
    _
  $region19: #{lstm_poetry_forward.1} parent=0 // pred_check_branch
    %25 = sbr.rel (0) target = $region21
  $region20: #{lstm_poetry_forward.1} parent=0 // pred_region
    _
  $region21: #{lstm_poetry_forward.1} parent=0 // pred_fallthru
    _
  // Predicated region
  $region22: #{lstm_poetry_forward.1} parent=0 // pred_check
    _
  $region23: #{lstm_poetry_forward.1} parent=0 // pred_check_branch
    %27 = sbr.rel (0) target = $region25
  $region24: #{lstm_poetry_forward.1} parent=0 // pred_region
    _
  $region25: #{lstm_poetry_forward.1} parent=0 // pred_fallthru
    _
  // Predicated region
  $region26: #{lstm_poetry_forward.1} parent=0 // pred_check
    _
  $region27: #{lstm_poetry_forward.1} parent=0 // pred_check_branch
    %29 = sbr.rel (0) target = $region29
  $region28: #{lstm_poetry_forward.1} parent=0 // pred_region
    _
  $region29: #{lstm_poetry_forward.1} parent=0 // pred_fallthru
    _
  // Predicated region
  $region30: #{lstm_poetry_forward.1} parent=0 // pred_check
    _
  $region31: #{lstm_poetry_forward.1} parent=0 // pred_check_branch
    %31 = sbr.rel (0) target = $region33
  $region32: #{lstm_poetry_forward.1} parent=0 // pred_region
    _
  $region33: #{lstm_poetry_forward.1} parent=0 // pred_fallthru
    _
  %v32 = vld [vmem:[%s0] sm:$0xf]
  %v33 = vld [vmem:[%s0 + $0x4] sm:$0xf]
  %v34 = vld [vmem:[%s0 + $0x8] sm:$0xf]
  %v35 = vld [vmem:[%s0 + $0xc] sm:$0xf]
  %v36 = vld [vmem:[%s0 + $0x10] sm:$0xf]
  %v37 = vld [vmem:[%s0 + $0x14] sm:$0xf]
  %v38 = vld [vmem:[%s0 + $0x18] sm:$0xf]
  %v39 = vld [vmem:[%s0 + $0x1c] sm:$0xf]
  %v40 = vld [vmem:[%s3] sm:$0xff]
  %v41 = vld [vmem:[%s3 + $0x8] sm:$0xff]
  %v42 = vld [vmem:[%s3 + $0x10] sm:$0xff]
  %v43 = vld [vmem:[%s3 + $0x18] sm:$0xff]
  %v44 = vld [vmem:[%s3 + $0x20] sm:$0xff]
  %v45 = vld [vmem:[%s3 + $0x28] sm:$0xff]
  %v46 = vld [vmem:[%s3 + $0x30] sm:$0xff]
  %v47 = vld [vmem:[%s3 + $0x38] sm:$0xff]
  %v48 = vld [vmem:[%s3 + $0x40] sm:$0xff]
  %v49 = vld [vmem:[%s3 + $0x48] sm:$0xff]
  %v50 = vld [vmem:[%s3 + $0x50] sm:$0xff]
  %v51 = vld [vmem:[%s3 + $0x58] sm:$0xff]
  %v52 = vld [vmem:[%s3 + $0x60] sm:$0xff]
  %v53 = vld [vmem:[%s3 + $0x68] sm:$0xff]
  %v54 = vld [vmem:[%s3 + $0x70] sm:$0xff]
  %v55 = vld [vmem:[%s3 + $0x78] sm:$0xff]
  %v56 = vld [vmem:[%s3 + $0x80] sm:$0xff]
  %v57 = vld [vmem:[%s3 + $0x88] sm:$0xff]
  %v58 = vld [vmem:[%s3 + $0x90] sm:$0xff]
  %v59 = vld [vmem:[%s3 + $0x98] sm:$0xff]
  %v60 = vld [vmem:[%s3 + $0xa0] sm:$0xff]
  %v61 = vld [vmem:[%s3 + $0xa8] sm:$0xff]
  %v62 = vld [vmem:[%s3 + $0xb0] sm:$0xff]
  %v63 = vld [vmem:[%s3 + $0xb8] sm:$0xff]
  %v64 = vld [vmem:[%s3 + $0xc0] sm:$0xff]
  %v65 = vld [vmem:[%s3 + $0xc8] sm:$0xff]
  %v66 = vld [vmem:[%s3 + $0xd0] sm:$0xff]
  %v67 = vld [vmem:[%s3 + $0xd8] sm:$0xff]
  %v68 = vld [vmem:[%s3 + $0xe0] sm:$0xff]
  %v69 = vld [vmem:[%s3 + $0xe8] sm:$0xff]
  %v70 = vld [vmem:[%s3 + $0xf0] sm:$0xff]
  %v71 = vld [vmem:[%s3 + $0xf8] sm:$0xff]
  %v72 = vld [vmem:[%s5] sm:$0xf]
  %v74 = vperm.slane %v72, 0
  %v75 = vperm.slane %v72, 1
  %v76 = vperm.slane %v72, 2
  %v77 = vperm.slane %v72, 3
  %v90 = vunpack.c.l.b16 %v32
  %v91 = vunpack.c.l.b16 %v33
  %v92 = vunpack.c.l.b16 %v34
  %v93 = vunpack.c.l.b16 %v35
  %v94 = vunpack.c.l.b16 %v36
  %v95 = vunpack.c.l.b16 %v37
  %v96 = vunpack.c.l.b16 %v38
  %v97 = vunpack.c.l.b16 %v39
  %v98 = vpack.c.b16 %v91, %v90
  %v99 = vpack.c.b16 %v93, %v92
  %v100 = vpack.c.b16 %v95, %v94
  %v101 = vpack.c.b16 %v97, %v96
  %v138 = vunpack.c.l.b16 %v40
  %v139 = vunpack.c.h.b16 %v40
  %v140 = vunpack.c.l.b16 %v41
  %v141 = vunpack.c.h.b16 %v41
  %v142 = vunpack.c.l.b16 %v42
  %v143 = vunpack.c.h.b16 %v42
  %v144 = vunpack.c.l.b16 %v43
  %v145 = vunpack.c.h.b16 %v43
  %v146 = vunpack.c.l.b16 %v44
  %v147 = vunpack.c.h.b16 %v44
  %v148 = vunpack.c.l.b16 %v45
  %v149 = vunpack.c.h.b16 %v45
  %v150 = vunpack.c.l.b16 %v46
  %v151 = vunpack.c.h.b16 %v46
  %v152 = vunpack.c.l.b16 %v47
  %v153 = vunpack.c.h.b16 %v47
  %v154 = vunpack.c.l.b16 %v48
  %v155 = vunpack.c.h.b16 %v48
  %v156 = vunpack.c.l.b16 %v49
  %v157 = vunpack.c.h.b16 %v49
  %v158 = vunpack.c.l.b16 %v50
  %v159 = vunpack.c.h.b16 %v50
  %v160 = vunpack.c.l.b16 %v51
  %v161 = vunpack.c.h.b16 %v51
  %v162 = vunpack.c.l.b16 %v52
  %v163 = vunpack.c.h.b16 %v52
  %v164 = vunpack.c.l.b16 %v53
  %v165 = vunpack.c.h.b16 %v53
  %v166 = vunpack.c.l.b16 %v54
  %v167 = vunpack.c.h.b16 %v54
  %v168 = vunpack.c.l.b16 %v55
  %v169 = vunpack.c.h.b16 %v55
  %v170 = vunpack.c.l.b16 %v56
  %v171 = vunpack.c.h.b16 %v56
  %v172 = vunpack.c.l.b16 %v57
  %v173 = vunpack.c.h.b16 %v57
  %v174 = vunpack.c.l.b16 %v58
  %v175 = vunpack.c.h.b16 %v58
  %v176 = vunpack.c.l.b16 %v59
  %v177 = vunpack.c.h.b16 %v59
  %v178 = vunpack.c.l.b16 %v60
  %v179 = vunpack.c.h.b16 %v60
  %v180 = vunpack.c.l.b16 %v61
  %v181 = vunpack.c.h.b16 %v61
  %v182 = vunpack.c.l.b16 %v62
  %v183 = vunpack.c.h.b16 %v62
  %v184 = vunpack.c.l.b16 %v63
  %v185 = vunpack.c.h.b16 %v63
  %v186 = vunpack.c.l.b16 %v64
  %v187 = vunpack.c.h.b16 %v64
  %v188 = vunpack.c.l.b16 %v65
  %v189 = vunpack.c.h.b16 %v65
  %v190 = vunpack.c.l.b16 %v66
  %v191 = vunpack.c.h.b16 %v66
  %v192 = vunpack.c.l.b16 %v67
  %v193 = vunpack.c.h.b16 %v67
  %v194 = vunpack.c.l.b16 %v68
  %v195 = vunpack.c.h.b16 %v68
  %v196 = vunpack.c.l.b16 %v69
  %v197 = vunpack.c.h.b16 %v69
  %v198 = vunpack.c.l.b16 %v70
  %v199 = vunpack.c.h.b16 %v70
  %v200 = vunpack.c.l.b16 %v71
  %v201 = vunpack.c.h.b16 %v71
  %v202 = vpack.c.b16 %v142, %v138
  %v203 = vpack.c.b16 %v143, %v139
  %v204 = vpack.c.b16 %v144, %v140
  %v205 = vpack.c.b16 %v145, %v141
  %v206 = vpack.c.b16 %v150, %v146
  %v207 = vpack.c.b16 %v151, %v147
  %v208 = vpack.c.b16 %v152, %v148
  %v209 = vpack.c.b16 %v153, %v149
  %v210 = vpack.c.b16 %v158, %v154
  %v211 = vpack.c.b16 %v159, %v155
  %v212 = vpack.c.b16 %v160, %v156
  %v213 = vpack.c.b16 %v161, %v157
  %v214 = vpack.c.b16 %v166, %v162
  %v215 = vpack.c.b16 %v167, %v163
  %v216 = vpack.c.b16 %v168, %v164
  %v217 = vpack.c.b16 %v169, %v165
  %v218 = vpack.c.b16 %v174, %v170
  %v219 = vpack.c.b16 %v175, %v171
  %v220 = vpack.c.b16 %v176, %v172
  %v221 = vpack.c.b16 %v177, %v173
  %v222 = vpack.c.b16 %v182, %v178
  %v223 = vpack.c.b16 %v183, %v179
  %v224 = vpack.c.b16 %v184, %v180
  %v225 = vpack.c.b16 %v185, %v181
  %v226 = vpack.c.b16 %v190, %v186
  %v227 = vpack.c.b16 %v191, %v187
  %v228 = vpack.c.b16 %v192, %v188
  %v229 = vpack.c.b16 %v193, %v189
  %v230 = vpack.c.b16 %v198, %v194
  %v231 = vpack.c.b16 %v199, %v195
  %v232 = vpack.c.b16 %v200, %v196
  %v233 = vpack.c.b16 %v201, %v197
  %266 = vmatpush.bf16.msra.mxu0 %v230
  %267 = vmatpush.bf16.msra.mxu0 %v226
  %268 = vmatpush.bf16.msra.mxu0 %v222
  %269 = vmatpush.bf16.msra.mxu0 %v218
  %270 = vmatpush.bf16.msra.mxu0 %v214
  %271 = vmatpush.bf16.msra.mxu0 %v210
  %272 = vmatpush.bf16.msra.mxu0 %v206
  %273 = vmatpush.bf16.msra.mxu0 %v202
  %274 = vmatmul.bf16.gmra.mxu0 %v98
  %v275 = vpop.f32.mrf.mxu0
  %v276 = vadd.f32 %v74, %v275
  %v277 = vpop.f32.mrf.mxu0
  %v278 = vadd.f32 %v74, %v277
  %279 = vmatmul.bf16.gmra.mxu0 %v99
  %v280 = vpop.f32.mrf.mxu0
  %v281 = vadd.f32 %v74, %v280
  %v282 = vpop.f32.mrf.mxu0
  %v283 = vadd.f32 %v74, %v282
  %284 = vmatmul.bf16.gmra.mxu0 %v100
  %v285 = vpop.f32.mrf.mxu0
  %v286 = vadd.f32 %v74, %v285
  %v287 = vpop.f32.mrf.mxu0
  %v288 = vadd.f32 %v74, %v287
  %289 = vmatmul.bf16.gmra.mxu0 %v101
  %v290 = vpop.f32.mrf.mxu0
  %v291 = vadd.f32 %v74, %v290
  %v292 = vpop.f32.mrf.mxu0
  %v293 = vadd.f32 %v74, %v292
  %294 = vdwg.mxu0
  %295 = vmatpush.bf16.msra.mxu0 %v231
  %296 = vmatpush.bf16.msra.mxu0 %v227
  %297 = vmatpush.bf16.msra.mxu0 %v223
  %298 = vmatpush.bf16.msra.mxu0 %v219
  %299 = vmatpush.bf16.msra.mxu0 %v215
  %300 = vmatpush.bf16.msra.mxu0 %v211
  %301 = vmatpush.bf16.msra.mxu0 %v207
  %302 = vmatpush.bf16.msra.mxu0 %v203
  %303 = vmatmul.bf16.gmra.mxu0 %v98
  %v304 = vpop.f32.mrf.mxu0
  %v305 = vadd.f32 %v75, %v304
  %v306 = vpop.f32.mrf.mxu0
  %v307 = vadd.f32 %v75, %v306
  %308 = vmatmul.bf16.gmra.mxu0 %v99
  %v309 = vpop.f32.mrf.mxu0
  %v310 = vadd.f32 %v75, %v309
  %v311 = vpop.f32.mrf.mxu0
  %v312 = vadd.f32 %v75, %v311
  %313 = vmatmul.bf16.gmra.mxu0 %v100
  %v314 = vpop.f32.mrf.mxu0
  %v315 = vadd.f32 %v75, %v314
  %v316 = vpop.f32.mrf.mxu0
  %v317 = vadd.f32 %v75, %v316
  %318 = vmatmul.bf16.gmra.mxu0 %v101
  %v319 = vpop.f32.mrf.mxu0
  %v320 = vadd.f32 %v75, %v319
  %v321 = vpop.f32.mrf.mxu0
  %v322 = vadd.f32 %v75, %v321
  %323 = vdwg.mxu0
  %324 = vmatpush.bf16.msra.mxu0 %v232
  %325 = vmatpush.bf16.msra.mxu0 %v228
  %326 = vmatpush.bf16.msra.mxu0 %v224
  %327 = vmatpush.bf16.msra.mxu0 %v220
  %328 = vmatpush.bf16.msra.mxu0 %v216
  %329 = vmatpush.bf16.msra.mxu0 %v212
  %330 = vmatpush.bf16.msra.mxu0 %v208
  %331 = vmatpush.bf16.msra.mxu0 %v204
  %332 = vmatmul.bf16.gmra.mxu0 %v98
  %v333 = vpop.f32.mrf.mxu0
  %v334 = vadd.f32 %v76, %v333
  %v335 = vpop.f32.mrf.mxu0
  %v336 = vadd.f32 %v76, %v335
  %337 = vmatmul.bf16.gmra.mxu0 %v99
  %v338 = vpop.f32.mrf.mxu0
  %v339 = vadd.f32 %v76, %v338
  %v340 = vpop.f32.mrf.mxu0
  %v341 = vadd.f32 %v76, %v340
  %342 = vmatmul.bf16.gmra.mxu0 %v100
  %v343 = vpop.f32.mrf.mxu0
  %v344 = vadd.f32 %v76, %v343
  %v345 = vpop.f32.mrf.mxu0
  %v346 = vadd.f32 %v76, %v345
  %347 = vmatmul.bf16.gmra.mxu0 %v101
  %v348 = vpop.f32.mrf.mxu0
  %v349 = vadd.f32 %v76, %v348
  %v350 = vpop.f32.mrf.mxu0
  %v351 = vadd.f32 %v76, %v350
  %352 = vdwg.mxu0
  %353 = vmatpush.bf16.msra.mxu0 %v233
  %354 = vmatpush.bf16.msra.mxu0 %v229
  %355 = vmatpush.bf16.msra.mxu0 %v225
  %356 = vmatpush.bf16.msra.mxu0 %v221
  %357 = vmatpush.bf16.msra.mxu0 %v217
  %358 = vmatpush.bf16.msra.mxu0 %v213
  %359 = vmatpush.bf16.msra.mxu0 %v209
  %360 = vmatpush.bf16.msra.mxu0 %v205
  %361 = vmatmul.bf16.gmra.mxu0 %v98
  %v362 = vpop.f32.mrf.mxu0
  %v363 = vadd.f32 %v77, %v362
  %v364 = vpop.f32.mrf.mxu0
  %v365 = vadd.f32 %v77, %v364
  %366 = vmatmul.bf16.gmra.mxu0 %v99
  %v367 = vpop.f32.mrf.mxu0
  %v368 = vadd.f32 %v77, %v367
  %v369 = vpop.f32.mrf.mxu0
  %v370 = vadd.f32 %v77, %v369
  %371 = vmatmul.bf16.gmra.mxu0 %v100
  %v372 = vpop.f32.mrf.mxu0
  %v373 = vadd.f32 %v77, %v372
  %v374 = vpop.f32.mrf.mxu0
  %v375 = vadd.f32 %v77, %v374
  %376 = vmatmul.bf16.gmra.mxu0 %v101
  %v377 = vpop.f32.mrf.mxu0
  %v378 = vadd.f32 %v77, %v377
  %v379 = vpop.f32.mrf.mxu0
  %v380 = vadd.f32 %v77, %v379
  %381 = vdwg.mxu0
  %v382 = vld [vmem:[%s4] sm:$0xff]
  %v383 = vld [vmem:[%s4 + $0x8] sm:$0xff]
  %v384 = vld [vmem:[%s4 + $0x10] sm:$0xff]
  %v385 = vld [vmem:[%s4 + $0x18] sm:$0xff]
  %v386 = vld [vmem:[%s4 + $0x20] sm:$0xff]
  %v387 = vld [vmem:[%s4 + $0x28] sm:$0xff]
  %v388 = vld [vmem:[%s4 + $0x30] sm:$0xff]
  %v389 = vld [vmem:[%s4 + $0x38] sm:$0xff]
  %v390 = vld [vmem:[%s4 + $0x40] sm:$0xff]
  %v391 = vld [vmem:[%s4 + $0x48] sm:$0xff]
  %v392 = vld [vmem:[%s4 + $0x50] sm:$0xff]
  %v393 = vld [vmem:[%s4 + $0x58] sm:$0xff]
  %v394 = vld [vmem:[%s4 + $0x60] sm:$0xff]
  %v395 = vld [vmem:[%s4 + $0x68] sm:$0xff]
  %v396 = vld [vmem:[%s4 + $0x70] sm:$0xff]
  %v397 = vld [vmem:[%s4 + $0x78] sm:$0xff]
  %v398 = vld [vmem:[%s4 + $0x80] sm:$0xff]
  %v399 = vld [vmem:[%s4 + $0x88] sm:$0xff]
  %v400 = vld [vmem:[%s4 + $0x90] sm:$0xff]
  %v401 = vld [vmem:[%s4 + $0x98] sm:$0xff]
  %v402 = vld [vmem:[%s4 + $0xa0] sm:$0xff]
  %v403 = vld [vmem:[%s4 + $0xa8] sm:$0xff]
  %v404 = vld [vmem:[%s4 + $0xb0] sm:$0xff]
  %v405 = vld [vmem:[%s4 + $0xb8] sm:$0xff]
  %v406 = vld [vmem:[%s4 + $0xc0] sm:$0xff]
  %v407 = vld [vmem:[%s4 + $0xc8] sm:$0xff]
  %v408 = vld [vmem:[%s4 + $0xd0] sm:$0xff]
  %v409 = vld [vmem:[%s4 + $0xd8] sm:$0xff]
  %v410 = vld [vmem:[%s4 + $0xe0] sm:$0xff]
  %v411 = vld [vmem:[%s4 + $0xe8] sm:$0xff]
  %v412 = vld [vmem:[%s4 + $0xf0] sm:$0xff]
  %v413 = vld [vmem:[%s4 + $0xf8] sm:$0xff]
  %v414 = vld [vmem:[%s1] sm:$0xff]
  %v415 = vld [vmem:[%s2] sm:$0xff]
  %v416 = vpack.c.bf16 %v414, %v414
  %v449 = vunpack.c.l.b16 %v382
  %v450 = vunpack.c.h.b16 %v382
  %v451 = vunpack.c.l.b16 %v383
  %v452 = vunpack.c.h.b16 %v383
  %v453 = vunpack.c.l.b16 %v384
  %v454 = vunpack.c.h.b16 %v384
  %v455 = vunpack.c.l.b16 %v385
  %v456 = vunpack.c.h.b16 %v385
  %v457 = vunpack.c.l.b16 %v386
  %v458 = vunpack.c.h.b16 %v386
  %v459 = vunpack.c.l.b16 %v387
  %v460 = vunpack.c.h.b16 %v387
  %v461 = vunpack.c.l.b16 %v388
  %v462 = vunpack.c.h.b16 %v388
  %v463 = vunpack.c.l.b16 %v389
  %v464 = vunpack.c.h.b16 %v389
  %v465 = vunpack.c.l.b16 %v390
  %v466 = vunpack.c.h.b16 %v390
  %v467 = vunpack.c.l.b16 %v391
  %v468 = vunpack.c.h.b16 %v391
  %v469 = vunpack.c.l.b16 %v392
  %v470 = vunpack.c.h.b16 %v392
  %v471 = vunpack.c.l.b16 %v393
  %v472 = vunpack.c.h.b16 %v393
  %v473 = vunpack.c.l.b16 %v394
  %v474 = vunpack.c.h.b16 %v394
  %v475 = vunpack.c.l.b16 %v395
  %v476 = vunpack.c.h.b16 %v395
  %v477 = vunpack.c.l.b16 %v396
  %v478 = vunpack.c.h.b16 %v396
  %v479 = vunpack.c.l.b16 %v397
  %v480 = vunpack.c.h.b16 %v397
  %v481 = vunpack.c.l.b16 %v398
  %v482 = vunpack.c.h.b16 %v398
  %v483 = vunpack.c.l.b16 %v399
  %v484 = vunpack.c.h.b16 %v399
  %v485 = vunpack.c.l.b16 %v400
  %v486 = vunpack.c.h.b16 %v400
  %v487 = vunpack.c.l.b16 %v401
  %v488 = vunpack.c.h.b16 %v401
  %v489 = vunpack.c.l.b16 %v402
  %v490 = vunpack.c.h.b16 %v402
  %v491 = vunpack.c.l.b16 %v403
  %v492 = vunpack.c.h.b16 %v403
  %v493 = vunpack.c.l.b16 %v404
  %v494 = vunpack.c.h.b16 %v404
  %v495 = vunpack.c.l.b16 %v405
  %v496 = vunpack.c.h.b16 %v405
  %v497 = vunpack.c.l.b16 %v406
  %v498 = vunpack.c.h.b16 %v406
  %v499 = vunpack.c.l.b16 %v407
  %v500 = vunpack.c.h.b16 %v407
  %v501 = vunpack.c.l.b16 %v408
  %v502 = vunpack.c.h.b16 %v408
  %v503 = vunpack.c.l.b16 %v409
  %v504 = vunpack.c.h.b16 %v409
  %v505 = vunpack.c.l.b16 %v410
  %v506 = vunpack.c.h.b16 %v410
  %v507 = vunpack.c.l.b16 %v411
  %v508 = vunpack.c.h.b16 %v411
  %v509 = vunpack.c.l.b16 %v412
  %v510 = vunpack.c.h.b16 %v412
  %v511 = vunpack.c.l.b16 %v413
  %v512 = vunpack.c.h.b16 %v413
  %v513 = vpack.c.b16 %v453, %v449
  %v514 = vpack.c.b16 %v454, %v450
  %v515 = vpack.c.b16 %v455, %v451
  %v516 = vpack.c.b16 %v456, %v452
  %v517 = vpack.c.b16 %v461, %v457
  %v518 = vpack.c.b16 %v462, %v458
  %v519 = vpack.c.b16 %v463, %v459
  %v520 = vpack.c.b16 %v464, %v460
  %v521 = vpack.c.b16 %v469, %v465
  %v522 = vpack.c.b16 %v470, %v466
  %v523 = vpack.c.b16 %v471, %v467
  %v524 = vpack.c.b16 %v472, %v468
  %v525 = vpack.c.b16 %v477, %v473
  %v526 = vpack.c.b16 %v478, %v474
  %v527 = vpack.c.b16 %v479, %v475
  %v528 = vpack.c.b16 %v480, %v476
  %v529 = vpack.c.b16 %v485, %v481
  %v530 = vpack.c.b16 %v486, %v482
  %v531 = vpack.c.b16 %v487, %v483
  %v532 = vpack.c.b16 %v488, %v484
  %v533 = vpack.c.b16 %v493, %v489
  %v534 = vpack.c.b16 %v494, %v490
  %v535 = vpack.c.b16 %v495, %v491
  %v536 = vpack.c.b16 %v496, %v492
  %v537 = vpack.c.b16 %v501, %v497
  %v538 = vpack.c.b16 %v502, %v498
  %v539 = vpack.c.b16 %v503, %v499
  %v540 = vpack.c.b16 %v504, %v500
  %v541 = vpack.c.b16 %v509, %v505
  %v542 = vpack.c.b16 %v510, %v506
  %v543 = vpack.c.b16 %v511, %v507
  %v544 = vpack.c.b16 %v512, %v508
  %577 = vmatpush.bf16.msra.mxu0 %v541
  %578 = vmatpush.bf16.msra.mxu0 %v537
  %579 = vmatpush.bf16.msra.mxu0 %v533
  %580 = vmatpush.bf16.msra.mxu0 %v529
  %581 = vmatpush.bf16.msra.mxu0 %v525
  %582 = vmatpush.bf16.msra.mxu0 %v521
  %583 = vmatpush.bf16.msra.mxu0 %v517
  %584 = vmatpush.bf16.msra.mxu0 %v513
  %585 = vmatmul.bf16.gmra.mxu0 %v416
  %v586 = vpop.f32.mrf.mxu0
  %v587 = vadd.f32 0.0, %v586
  %v588 = vpop.f32.mrf.mxu0
  %589 = vdwg.mxu0
  %590 = vmatpush.bf16.msra.mxu0 %v542
  %591 = vmatpush.bf16.msra.mxu0 %v538
  %592 = vmatpush.bf16.msra.mxu0 %v534
  %593 = vmatpush.bf16.msra.mxu0 %v530
  %594 = vmatpush.bf16.msra.mxu0 %v526
  %595 = vmatpush.bf16.msra.mxu0 %v522
  %596 = vmatpush.bf16.msra.mxu0 %v518
  %597 = vmatpush.bf16.msra.mxu0 %v514
  %598 = vmatmul.bf16.gmra.mxu0 %v416
  %v599 = vpop.f32.mrf.mxu0
  %v600 = vadd.f32 0.0, %v599
  %v601 = vpop.f32.mrf.mxu0
  %602 = vdwg.mxu0
  %603 = vmatpush.bf16.msra.mxu0 %v543
  %604 = vmatpush.bf16.msra.mxu0 %v539
  %605 = vmatpush.bf16.msra.mxu0 %v535
  %606 = vmatpush.bf16.msra.mxu0 %v531
  %607 = vmatpush.bf16.msra.mxu0 %v527
  %608 = vmatpush.bf16.msra.mxu0 %v523
  %609 = vmatpush.bf16.msra.mxu0 %v519
  %610 = vmatpush.bf16.msra.mxu0 %v515
  %611 = vmatmul.bf16.gmra.mxu0 %v416
  %v612 = vpop.f32.mrf.mxu0
  %v613 = vadd.f32 0.0, %v612
  %v614 = vpop.f32.mrf.mxu0
  %615 = vdwg.mxu0
  %616 = vmatpush.bf16.msra.mxu0 %v544
  %617 = vmatpush.bf16.msra.mxu0 %v540
  %618 = vmatpush.bf16.msra.mxu0 %v536
  %619 = vmatpush.bf16.msra.mxu0 %v532
  %620 = vmatpush.bf16.msra.mxu0 %v528
  %621 = vmatpush.bf16.msra.mxu0 %v524
  %622 = vmatpush.bf16.msra.mxu0 %v520
  %623 = vmatpush.bf16.msra.mxu0 %v516
  %624 = vmatmul.bf16.gmra.mxu0 %v416
  %v625 = vpop.f32.mrf.mxu0
  %v626 = vadd.f32 0.0, %v625
  %v627 = vpop.f32.mrf.mxu0
  %628 = vdwg.mxu0
  %v629 = vadd.f32 %v276, %v587
  %v630 = vadd.f32 %v305, %v600
  %v631 = vadd.f32 %v334, %v613
  %v632 = vadd.f32 %v363, %v626
  %v633 = vxor.u32 %v629, 2147483648
  %v634 = vmul.f32 %v633, 1.442695
  %v635 = vpow.pop %v634
  %v636 = vadd.f32 %v635, 1.0
  %v637 = vrcp.pop %v636
  %v638 = vmul.f32 %v636, %v637
  %v639 = vsub.f32 1.0, %v638
  %v640 = vmul.f32 %v637, %v639
  %v641 = vadd.f32 %v637, %v640
  %vm642 = vweird.f32 %v636
  %vm643 = vweird.f32 %v637
  %vm644 = vmor %vm642, %vm643
  %v645 = vsel %vm644, %v637, %v641
  %v646 = vand.u32 2147483647, %v636
  %vm647 = vcmp.eq.f32.partialorder %v646, 8.507059e+37
  %v648 = vand.u32 %v636, 2147483648
  %v649 = vor.u32 1.1754944e-38, %v648
  %v650 = vsel %vm647, %v649, %v645
  %v651 = vmul.f32 1.0, %v650
  %v652 = vxor.u32 %v630, 2147483648
  %v653 = vmul.f32 %v652, 1.442695
  %v654 = vpow.pop %v653
  %v655 = vadd.f32 %v654, 1.0
  %v656 = vrcp.pop %v655
  %v657 = vmul.f32 %v655, %v656
  %v658 = vsub.f32 1.0, %v657
  %v659 = vmul.f32 %v656, %v658
  %v660 = vadd.f32 %v656, %v659
  %vm661 = vweird.f32 %v655
  %vm662 = vweird.f32 %v656
  %vm663 = vmor %vm661, %vm662
  %v664 = vsel %vm663, %v656, %v660
  %v665 = vand.u32 2147483647, %v655
  %vm666 = vcmp.eq.f32.partialorder %v665, 8.507059e+37
  %v667 = vand.u32 %v655, 2147483648
  %v668 = vor.u32 1.1754944e-38, %v667
  %v669 = vsel %vm666, %v668, %v664
  %v670 = vmul.f32 1.0, %v669
  %v671 = vtanh.pop %v631
  %v672 = vxor.u32 %v632, 2147483648
  %v673 = vmul.f32 %v672, 1.442695
  %v674 = vpow.pop %v673
  %v675 = vadd.f32 %v674, 1.0
  %v676 = vrcp.pop %v675
  %v677 = vmul.f32 %v675, %v676
  %v678 = vsub.f32 1.0, %v677
  %v679 = vmul.f32 %v676, %v678
  %v680 = vadd.f32 %v676, %v679
  %vm681 = vweird.f32 %v675
  %vm682 = vweird.f32 %v676
  %vm683 = vmor %vm681, %vm682
  %v684 = vsel %vm683, %v676, %v680
  %v685 = vand.u32 2147483647, %v675
  %vm686 = vcmp.eq.f32.partialorder %v685, 8.507059e+37
  %v687 = vand.u32 %v675, 2147483648
  %v688 = vor.u32 1.1754944e-38, %v687
  %v689 = vsel %vm686, %v688, %v684
  %v690 = vmul.f32 1.0, %v689
  %v691 = vmul.f32 %v670, %v415
  %v692 = vmul.f32 %v651, %v671
  %v693 = vadd.f32 %v691, %v692
  %v694 = vtanh.pop %v693
  %v695 = vmul.f32 %v690, %v694
  %v696 = vpack.c.bf16 %v695, %v695
  %697 = vmatpush.bf16.msra.mxu0 %v541
  %698 = vmatpush.bf16.msra.mxu0 %v537
  %699 = vmatpush.bf16.msra.mxu0 %v533
  %700 = vmatpush.bf16.msra.mxu0 %v529
  %701 = vmatpush.bf16.msra.mxu0 %v525
  %702 = vmatpush.bf16.msra.mxu0 %v521
  %703 = vmatpush.bf16.msra.mxu0 %v517
  %704 = vmatpush.bf16.msra.mxu0 %v513
  %705 = vmatmul.bf16.gmra.mxu0 %v696
  %v706 = vpop.f32.mrf.mxu0
  %v707 = vadd.f32 0.0, %v706
  %v708 = vpop.f32.mrf.mxu0
  %709 = vdwg.mxu0
  %710 = vmatpush.bf16.msra.mxu0 %v542
  %711 = vmatpush.bf16.msra.mxu0 %v538
  %712 = vmatpush.bf16.msra.mxu0 %v534
  %713 = vmatpush.bf16.msra.mxu0 %v530
  %714 = vmatpush.bf16.msra.mxu0 %v526
  %715 = vmatpush.bf16.msra.mxu0 %v522
  %716 = vmatpush.bf16.msra.mxu0 %v518
  %717 = vmatpush.bf16.msra.mxu0 %v514
  %718 = vmatmul.bf16.gmra.mxu0 %v696
  %v719 = vpop.f32.mrf.mxu0
  %v720 = vadd.f32 0.0, %v719
  %v721 = vpop.f32.mrf.mxu0
  %722 = vdwg.mxu0
  %723 = vmatpush.bf16.msra.mxu0 %v543
  %724 = vmatpush.bf16.msra.mxu0 %v539
  %725 = vmatpush.bf16.msra.mxu0 %v535
  %726 = vmatpush.bf16.msra.mxu0 %v531
  %727 = vmatpush.bf16.msra.mxu0 %v527
  %728 = vmatpush.bf16.msra.mxu0 %v523
  %729 = vmatpush.bf16.msra.mxu0 %v519
  %730 = vmatpush.bf16.msra.mxu0 %v515
  %731 = vmatmul.bf16.gmra.mxu0 %v696
  %v732 = vpop.f32.mrf.mxu0
  %v733 = vadd.f32 0.0, %v732
  %v734 = vpop.f32.mrf.mxu0
  %735 = vdwg.mxu0
  %736 = vmatpush.bf16.msra.mxu0 %v544
  %737 = vmatpush.bf16.msra.mxu0 %v540
  %738 = vmatpush.bf16.msra.mxu0 %v536
  %739 = vmatpush.bf16.msra.mxu0 %v532
  %740 = vmatpush.bf16.msra.mxu0 %v528
  %741 = vmatpush.bf16.msra.mxu0 %v524
  %742 = vmatpush.bf16.msra.mxu0 %v520
  %743 = vmatpush.bf16.msra.mxu0 %v516
  %744 = vmatmul.bf16.gmra.mxu0 %v696
  %v745 = vpop.f32.mrf.mxu0
  %v746 = vadd.f32 0.0, %v745
  %v747 = vpop.f32.mrf.mxu0
  %748 = vdwg.mxu0
  %v749 = vadd.f32 %v278, %v707
  %v750 = vadd.f32 %v307, %v720
  %v751 = vadd.f32 %v336, %v733
  %v752 = vadd.f32 %v365, %v746
  %v753 = vxor.u32 %v749, 2147483648
  %v754 = vmul.f32 %v753, 1.442695
  %v755 = vpow.pop %v754
  %v756 = vadd.f32 %v755, 1.0
  %v757 = vrcp.pop %v756
  %v758 = vmul.f32 %v756, %v757
  %v759 = vsub.f32 1.0, %v758
  %v760 = vmul.f32 %v757, %v759
  %v761 = vadd.f32 %v757, %v760
  %vm762 = vweird.f32 %v756
  %vm763 = vweird.f32 %v757
  %vm764 = vmor %vm762, %vm763
  %v765 = vsel %vm764, %v757, %v761
  %v766 = vand.u32 2147483647, %v756
  %vm767 = vcmp.eq.f32.partialorder %v766, 8.507059e+37
  %v768 = vand.u32 %v756, 2147483648
  %v769 = vor.u32 1.1754944e-38, %v768
  %v770 = vsel %vm767, %v769, %v765
  %v771 = vmul.f32 1.0, %v770
  %v772 = vxor.u32 %v750, 2147483648
  %v773 = vmul.f32 %v772, 1.442695
  %v774 = vpow.pop %v773
  %v775 = vadd.f32 %v774, 1.0
  %v776 = vrcp.pop %v775
  %v777 = vmul.f32 %v775, %v776
  %v778 = vsub.f32 1.0, %v777
  %v779 = vmul.f32 %v776, %v778
  %v780 = vadd.f32 %v776, %v779
  %vm781 = vweird.f32 %v775
  %vm782 = vweird.f32 %v776
  %vm783 = vmor %vm781, %vm782
  %v784 = vsel %vm783, %v776, %v780
  %v785 = vand.u32 2147483647, %v775
  %vm786 = vcmp.eq.f32.partialorder %v785, 8.507059e+37
  %v787 = vand.u32 %v775, 2147483648
  %v788 = vor.u32 1.1754944e-38, %v787
  %v789 = vsel %vm786, %v788, %v784
  %v790 = vmul.f32 1.0, %v789
  %v791 = vtanh.pop %v751
  %v792 = vxor.u32 %v752, 2147483648
  %v793 = vmul.f32 %v792, 1.442695
  %v794 = vpow.pop %v793
  %v795 = vadd.f32 %v794, 1.0
  %v796 = vrcp.pop %v795
  %v797 = vmul.f32 %v795, %v796
  %v798 = vsub.f32 1.0, %v797
  %v799 = vmul.f32 %v796, %v798
  %v800 = vadd.f32 %v796, %v799
  %vm801 = vweird.f32 %v795
  %vm802 = vweird.f32 %v796
  %vm803 = vmor %vm801, %vm802
  %v804 = vsel %vm803, %v796, %v800
  %v805 = vand.u32 2147483647, %v795
  %vm806 = vcmp.eq.f32.partialorder %v805, 8.507059e+37
  %v807 = vand.u32 %v795, 2147483648
  %v808 = vor.u32 1.1754944e-38, %v807
  %v809 = vsel %vm806, %v808, %v804
  %v810 = vmul.f32 1.0, %v809
  %v811 = vmul.f32 %v790, %v693
  %v812 = vmul.f32 %v771, %v791
  %v813 = vadd.f32 %v811, %v812
  %v814 = vtanh.pop %v813
  %v815 = vmul.f32 %v810, %v814
  %v816 = vpack.c.bf16 %v815, %v815
  %817 = vmatpush.bf16.msra.mxu0 %v541
  %818 = vmatpush.bf16.msra.mxu0 %v537
  %819 = vmatpush.bf16.msra.mxu0 %v533
  %820 = vmatpush.bf16.msra.mxu0 %v529
  %821 = vmatpush.bf16.msra.mxu0 %v525
  %822 = vmatpush.bf16.msra.mxu0 %v521
  %823 = vmatpush.bf16.msra.mxu0 %v517
  %824 = vmatpush.bf16.msra.mxu0 %v513
  %825 = vmatmul.bf16.gmra.mxu0 %v816
  %v826 = vpop.f32.mrf.mxu0
  %v827 = vadd.f32 0.0, %v826
  %v828 = vpop.f32.mrf.mxu0
  %829 = vdwg.mxu0
  %830 = vmatpush.bf16.msra.mxu0 %v542
  %831 = vmatpush.bf16.msra.mxu0 %v538
  %832 = vmatpush.bf16.msra.mxu0 %v534
  %833 = vmatpush.bf16.msra.mxu0 %v530
  %834 = vmatpush.bf16.msra.mxu0 %v526
  %835 = vmatpush.bf16.msra.mxu0 %v522
  %836 = vmatpush.bf16.msra.mxu0 %v518
  %837 = vmatpush.bf16.msra.mxu0 %v514
  %838 = vmatmul.bf16.gmra.mxu0 %v816
  %v839 = vpop.f32.mrf.mxu0
  %v840 = vadd.f32 0.0, %v839
  %v841 = vpop.f32.mrf.mxu0
  %842 = vdwg.mxu0
  %843 = vmatpush.bf16.msra.mxu0 %v543
  %844 = vmatpush.bf16.msra.mxu0 %v539
  %845 = vmatpush.bf16.msra.mxu0 %v535
  %846 = vmatpush.bf16.msra.mxu0 %v531
  %847 = vmatpush.bf16.msra.mxu0 %v527
  %848 = vmatpush.bf16.msra.mxu0 %v523
  %849 = vmatpush.bf16.msra.mxu0 %v519
  %850 = vmatpush.bf16.msra.mxu0 %v515
  %851 = vmatmul.bf16.gmra.mxu0 %v816
  %v852 = vpop.f32.mrf.mxu0
  %v853 = vadd.f32 0.0, %v852
  %v854 = vpop.f32.mrf.mxu0
  %855 = vdwg.mxu0
  %856 = vmatpush.bf16.msra.mxu0 %v544
  %857 = vmatpush.bf16.msra.mxu0 %v540
  %858 = vmatpush.bf16.msra.mxu0 %v536
  %859 = vmatpush.bf16.msra.mxu0 %v532
  %860 = vmatpush.bf16.msra.mxu0 %v528
  %861 = vmatpush.bf16.msra.mxu0 %v524
  %862 = vmatpush.bf16.msra.mxu0 %v520
  %863 = vmatpush.bf16.msra.mxu0 %v516
  %864 = vmatmul.bf16.gmra.mxu0 %v816
  %v865 = vpop.f32.mrf.mxu0
  %v866 = vadd.f32 0.0, %v865
  %v867 = vpop.f32.mrf.mxu0
  %868 = vdwg.mxu0
  %v869 = vadd.f32 %v281, %v827
  %v870 = vadd.f32 %v310, %v840
  %v871 = vadd.f32 %v339, %v853
  %v872 = vadd.f32 %v368, %v866
  %v873 = vxor.u32 %v869, 2147483648
  %v874 = vmul.f32 %v873, 1.442695
  %v875 = vpow.pop %v874
  %v876 = vadd.f32 %v875, 1.0
  %v877 = vrcp.pop %v876
  %v878 = vmul.f32 %v876, %v877
  %v879 = vsub.f32 1.0, %v878
  %v880 = vmul.f32 %v877, %v879
  %v881 = vadd.f32 %v877, %v880
  %vm882 = vweird.f32 %v876
  %vm883 = vweird.f32 %v877
  %vm884 = vmor %vm882, %vm883
  %v885 = vsel %vm884, %v877, %v881
  %v886 = vand.u32 2147483647, %v876
  %vm887 = vcmp.eq.f32.partialorder %v886, 8.507059e+37
  %v888 = vand.u32 %v876, 2147483648
  %v889 = vor.u32 1.1754944e-38, %v888
  %v890 = vsel %vm887, %v889, %v885
  %v891 = vmul.f32 1.0, %v890
  %v892 = vxor.u32 %v870, 2147483648
  %v893 = vmul.f32 %v892, 1.442695
  %v894 = vpow.pop %v893
  %v895 = vadd.f32 %v894, 1.0
  %v896 = vrcp.pop %v895
  %v897 = vmul.f32 %v895, %v896
  %v898 = vsub.f32 1.0, %v897
  %v899 = vmul.f32 %v896, %v898
  %v900 = vadd.f32 %v896, %v899
  %vm901 = vweird.f32 %v895
  %vm902 = vweird.f32 %v896
  %vm903 = vmor %vm901, %vm902
  %v904 = vsel %vm903, %v896, %v900
  %v905 = vand.u32 2147483647, %v895
  %vm906 = vcmp.eq.f32.partialorder %v905, 8.507059e+37
  %v907 = vand.u32 %v895, 2147483648
  %v908 = vor.u32 1.1754944e-38, %v907
  %v909 = vsel %vm906, %v908, %v904
  %v910 = vmul.f32 1.0, %v909
  %v911 = vtanh.pop %v871
  %v912 = vxor.u32 %v872, 2147483648
  %v913 = vmul.f32 %v912, 1.442695
  %v914 = vpow.pop %v913
  %v915 = vadd.f32 %v914, 1.0
  %v916 = vrcp.pop %v915
  %v917 = vmul.f32 %v915, %v916
  %v918 = vsub.f32 1.0, %v917
  %v919 = vmul.f32 %v916, %v918
  %v920 = vadd.f32 %v916, %v919
  %vm921 = vweird.f32 %v915
  %vm922 = vweird.f32 %v916
  %vm923 = vmor %vm921, %vm922
  %v924 = vsel %vm923, %v916, %v920
  %v925 = vand.u32 2147483647, %v915
  %vm926 = vcmp.eq.f32.partialorder %v925, 8.507059e+37
  %v927 = vand.u32 %v915, 2147483648
  %v928 = vor.u32 1.1754944e-38, %v927
  %v929 = vsel %vm926, %v928, %v924
  %v930 = vmul.f32 1.0, %v929
  %v931 = vmul.f32 %v910, %v813
  %v932 = vmul.f32 %v891, %v911
  %v933 = vadd.f32 %v931, %v932
  %v934 = vtanh.pop %v933
  %v935 = vmul.f32 %v930, %v934
  %v936 = vpack.c.bf16 %v935, %v935
  %937 = vmatpush.bf16.msra.mxu0 %v541
  %938 = vmatpush.bf16.msra.mxu0 %v537
  %939 = vmatpush.bf16.msra.mxu0 %v533
  %940 = vmatpush.bf16.msra.mxu0 %v529
  %941 = vmatpush.bf16.msra.mxu0 %v525
  %942 = vmatpush.bf16.msra.mxu0 %v521
  %943 = vmatpush.bf16.msra.mxu0 %v517
  %944 = vmatpush.bf16.msra.mxu0 %v513
  %945 = vmatmul.bf16.gmra.mxu0 %v936
  %v946 = vpop.f32.mrf.mxu0
  %v947 = vadd.f32 0.0, %v946
  %v948 = vpop.f32.mrf.mxu0
  %949 = vdwg.mxu0
  %950 = vmatpush.bf16.msra.mxu0 %v542
  %951 = vmatpush.bf16.msra.mxu0 %v538
  %952 = vmatpush.bf16.msra.mxu0 %v534
  %953 = vmatpush.bf16.msra.mxu0 %v530
  %954 = vmatpush.bf16.msra.mxu0 %v526
  %955 = vmatpush.bf16.msra.mxu0 %v522
  %956 = vmatpush.bf16.msra.mxu0 %v518
  %957 = vmatpush.bf16.msra.mxu0 %v514
  %958 = vmatmul.bf16.gmra.mxu0 %v936
  %v959 = vpop.f32.mrf.mxu0
  %v960 = vadd.f32 0.0, %v959
  %v961 = vpop.f32.mrf.mxu0
  %962 = vdwg.mxu0
  %963 = vmatpush.bf16.msra.mxu0 %v543
  %964 = vmatpush.bf16.msra.mxu0 %v539
  %965 = vmatpush.bf16.msra.mxu0 %v535
  %966 = vmatpush.bf16.msra.mxu0 %v531
  %967 = vmatpush.bf16.msra.mxu0 %v527
  %968 = vmatpush.bf16.msra.mxu0 %v523
  %969 = vmatpush.bf16.msra.mxu0 %v519
  %970 = vmatpush.bf16.msra.mxu0 %v515
  %971 = vmatmul.bf16.gmra.mxu0 %v936
  %v972 = vpop.f32.mrf.mxu0
  %v973 = vadd.f32 0.0, %v972
  %v974 = vpop.f32.mrf.mxu0
  %975 = vdwg.mxu0
  %976 = vmatpush.bf16.msra.mxu0 %v544
  %977 = vmatpush.bf16.msra.mxu0 %v540
  %978 = vmatpush.bf16.msra.mxu0 %v536
  %979 = vmatpush.bf16.msra.mxu0 %v532
  %980 = vmatpush.bf16.msra.mxu0 %v528
  %981 = vmatpush.bf16.msra.mxu0 %v524
  %982 = vmatpush.bf16.msra.mxu0 %v520
  %983 = vmatpush.bf16.msra.mxu0 %v516
  %984 = vmatmul.bf16.gmra.mxu0 %v936
  %v985 = vpop.f32.mrf.mxu0
  %v986 = vadd.f32 0.0, %v985
  %v987 = vpop.f32.mrf.mxu0
  %988 = vdwg.mxu0
  %v989 = vadd.f32 %v283, %v947
  %v990 = vadd.f32 %v312, %v960
  %v991 = vadd.f32 %v341, %v973
  %v992 = vadd.f32 %v370, %v986
  %v993 = vxor.u32 %v989, 2147483648
  %v994 = vmul.f32 %v993, 1.442695
  %v995 = vpow.pop %v994
  %v996 = vadd.f32 %v995, 1.0
  %v997 = vrcp.pop %v996
  %v998 = vmul.f32 %v996, %v997
  %v999 = vsub.f32 1.0, %v998
  %v1000 = vmul.f32 %v997, %v999
  %v1001 = vadd.f32 %v997, %v1000
  %vm1002 = vweird.f32 %v996
  %vm1003 = vweird.f32 %v997
  %vm1004 = vmor %vm1002, %vm1003
  %v1005 = vsel %vm1004, %v997, %v1001
  %v1006 = vand.u32 2147483647, %v996
  %vm1007 = vcmp.eq.f32.partialorder %v1006, 8.507059e+37
  %v1008 = vand.u32 %v996, 2147483648
  %v1009 = vor.u32 1.1754944e-38, %v1008
  %v1010 = vsel %vm1007, %v1009, %v1005
  %v1011 = vmul.f32 1.0, %v1010
  %v1012 = vxor.u32 %v990, 2147483648
  %v1013 = vmul.f32 %v1012, 1.442695
  %v1014 = vpow.pop %v1013
  %v1015 = vadd.f32 %v1014, 1.0
  %v1016 = vrcp.pop %v1015
  %v1017 = vmul.f32 %v1015, %v1016
  %v1018 = vsub.f32 1.0, %v1017
  %v1019 = vmul.f32 %v1016, %v1018
  %v1020 = vadd.f32 %v1016, %v1019
  %vm1021 = vweird.f32 %v1015
  %vm1022 = vweird.f32 %v1016
  %vm1023 = vmor %vm1021, %vm1022
  %v1024 = vsel %vm1023, %v1016, %v1020
  %v1025 = vand.u32 2147483647, %v1015
  %vm1026 = vcmp.eq.f32.partialorder %v1025, 8.507059e+37
  %v1027 = vand.u32 %v1015, 2147483648
  %v1028 = vor.u32 1.1754944e-38, %v1027
  %v1029 = vsel %vm1026, %v1028, %v1024
  %v1030 = vmul.f32 1.0, %v1029
  %v1031 = vtanh.pop %v991
  %v1032 = vxor.u32 %v992, 2147483648
  %v1033 = vmul.f32 %v1032, 1.442695
  %v1034 = vpow.pop %v1033
  %v1035 = vadd.f32 %v1034, 1.0
  %v1036 = vrcp.pop %v1035
  %v1037 = vmul.f32 %v1035, %v1036
  %v1038 = vsub.f32 1.0, %v1037
  %v1039 = vmul.f32 %v1036, %v1038
  %v1040 = vadd.f32 %v1036, %v1039
  %vm1041 = vweird.f32 %v1035
  %vm1042 = vweird.f32 %v1036
  %vm1043 = vmor %vm1041, %vm1042
  %v1044 = vsel %vm1043, %v1036, %v1040
  %v1045 = vand.u32 2147483647, %v1035
  %vm1046 = vcmp.eq.f32.partialorder %v1045, 8.507059e+37
  %v1047 = vand.u32 %v1035, 2147483648
  %v1048 = vor.u32 1.1754944e-38, %v1047
  %v1049 = vsel %vm1046, %v1048, %v1044
  %v1050 = vmul.f32 1.0, %v1049
  %v1051 = vmul.f32 %v1030, %v933
  %v1052 = vmul.f32 %v1011, %v1031
  %v1053 = vadd.f32 %v1051, %v1052
  %v1054 = vtanh.pop %v1053
  %v1055 = vmul.f32 %v1050, %v1054
  %v1056 = vpack.c.bf16 %v1055, %v1055
  %1057 = vmatpush.bf16.msra.mxu0 %v541
  %1058 = vmatpush.bf16.msra.mxu0 %v537
  %1059 = vmatpush.bf16.msra.mxu0 %v533
  %1060 = vmatpush.bf16.msra.mxu0 %v529
  %1061 = vmatpush.bf16.msra.mxu0 %v525
  %1062 = vmatpush.bf16.msra.mxu0 %v521
  %1063 = vmatpush.bf16.msra.mxu0 %v517
  %1064 = vmatpush.bf16.msra.mxu0 %v513
  %1065 = vmatmul.bf16.gmra.mxu0 %v1056
  %v1066 = vpop.f32.mrf.mxu0
  %v1067 = vadd.f32 0.0, %v1066
  %v1068 = vpop.f32.mrf.mxu0
  %1069 = vdwg.mxu0
  %1070 = vmatpush.bf16.msra.mxu0 %v542
  %1071 = vmatpush.bf16.msra.mxu0 %v538
  %1072 = vmatpush.bf16.msra.mxu0 %v534
  %1073 = vmatpush.bf16.msra.mxu0 %v530
  %1074 = vmatpush.bf16.msra.mxu0 %v526
  %1075 = vmatpush.bf16.msra.mxu0 %v522
  %1076 = vmatpush.bf16.msra.mxu0 %v518
  %1077 = vmatpush.bf16.msra.mxu0 %v514
  %1078 = vmatmul.bf16.gmra.mxu0 %v1056
  %v1079 = vpop.f32.mrf.mxu0
  %v1080 = vadd.f32 0.0, %v1079
  %v1081 = vpop.f32.mrf.mxu0
  %1082 = vdwg.mxu0
  %1083 = vmatpush.bf16.msra.mxu0 %v543
  %1084 = vmatpush.bf16.msra.mxu0 %v539
  %1085 = vmatpush.bf16.msra.mxu0 %v535
  %1086 = vmatpush.bf16.msra.mxu0 %v531
  %1087 = vmatpush.bf16.msra.mxu0 %v527
  %1088 = vmatpush.bf16.msra.mxu0 %v523
  %1089 = vmatpush.bf16.msra.mxu0 %v519
  %1090 = vmatpush.bf16.msra.mxu0 %v515
  %1091 = vmatmul.bf16.gmra.mxu0 %v1056
  %v1092 = vpop.f32.mrf.mxu0
  %v1093 = vadd.f32 0.0, %v1092
  %v1094 = vpop.f32.mrf.mxu0
  %1095 = vdwg.mxu0
  %1096 = vmatpush.bf16.msra.mxu0 %v544
  %1097 = vmatpush.bf16.msra.mxu0 %v540
  %1098 = vmatpush.bf16.msra.mxu0 %v536
  %1099 = vmatpush.bf16.msra.mxu0 %v532
  %1100 = vmatpush.bf16.msra.mxu0 %v528
  %1101 = vmatpush.bf16.msra.mxu0 %v524
  %1102 = vmatpush.bf16.msra.mxu0 %v520
  %1103 = vmatpush.bf16.msra.mxu0 %v516
  %1104 = vmatmul.bf16.gmra.mxu0 %v1056
  %v1105 = vpop.f32.mrf.mxu0
  %v1106 = vadd.f32 0.0, %v1105
  %v1107 = vpop.f32.mrf.mxu0
  %1108 = vdwg.mxu0
  %v1109 = vadd.f32 %v286, %v1067
  %v1110 = vadd.f32 %v315, %v1080
  %v1111 = vadd.f32 %v344, %v1093
  %v1112 = vadd.f32 %v373, %v1106
  %v1113 = vxor.u32 %v1109, 2147483648
  %v1114 = vmul.f32 %v1113, 1.442695
  %v1115 = vpow.pop %v1114
  %v1116 = vadd.f32 %v1115, 1.0
  %v1117 = vrcp.pop %v1116
  %v1118 = vmul.f32 %v1116, %v1117
  %v1119 = vsub.f32 1.0, %v1118
  %v1120 = vmul.f32 %v1117, %v1119
  %v1121 = vadd.f32 %v1117, %v1120
  %vm1122 = vweird.f32 %v1116
  %vm1123 = vweird.f32 %v1117
  %vm1124 = vmor %vm1122, %vm1123
  %v1125 = vsel %vm1124, %v1117, %v1121
  %v1126 = vand.u32 2147483647, %v1116
  %vm1127 = vcmp.eq.f32.partialorder %v1126, 8.507059e+37
  %v1128 = vand.u32 %v1116, 2147483648
  %v1129 = vor.u32 1.1754944e-38, %v1128
  %v1130 = vsel %vm1127, %v1129, %v1125
  %v1131 = vmul.f32 1.0, %v1130
  %v1132 = vxor.u32 %v1110, 2147483648
  %v1133 = vmul.f32 %v1132, 1.442695
  %v1134 = vpow.pop %v1133
  %v1135 = vadd.f32 %v1134, 1.0
  %v1136 = vrcp.pop %v1135
  %v1137 = vmul.f32 %v1135, %v1136
  %v1138 = vsub.f32 1.0, %v1137
  %v1139 = vmul.f32 %v1136, %v1138
  %v1140 = vadd.f32 %v1136, %v1139
  %vm1141 = vweird.f32 %v1135
  %vm1142 = vweird.f32 %v1136
  %vm1143 = vmor %vm1141, %vm1142
  %v1144 = vsel %vm1143, %v1136, %v1140
  %v1145 = vand.u32 2147483647, %v1135
  %vm1146 = vcmp.eq.f32.partialorder %v1145, 8.507059e+37
  %v1147 = vand.u32 %v1135, 2147483648
  %v1148 = vor.u32 1.1754944e-38, %v1147
  %v1149 = vsel %vm1146, %v1148, %v1144
  %v1150 = vmul.f32 1.0, %v1149
  %v1151 = vtanh.pop %v1111
  %v1152 = vxor.u32 %v1112, 2147483648
  %v1153 = vmul.f32 %v1152, 1.442695
  %v1154 = vpow.pop %v1153
  %v1155 = vadd.f32 %v1154, 1.0
  %v1156 = vrcp.pop %v1155
  %v1157 = vmul.f32 %v1155, %v1156
  %v1158 = vsub.f32 1.0, %v1157
  %v1159 = vmul.f32 %v1156, %v1158
  %v1160 = vadd.f32 %v1156, %v1159
  %vm1161 = vweird.f32 %v1155
  %vm1162 = vweird.f32 %v1156
  %vm1163 = vmor %vm1161, %vm1162
  %v1164 = vsel %vm1163, %v1156, %v1160
  %v1165 = vand.u32 2147483647, %v1155
  %vm1166 = vcmp.eq.f32.partialorder %v1165, 8.507059e+37
  %v1167 = vand.u32 %v1155, 2147483648
  %v1168 = vor.u32 1.1754944e-38, %v1167
  %v1169 = vsel %vm1166, %v1168, %v1164
  %v1170 = vmul.f32 1.0, %v1169
  %v1171 = vmul.f32 %v1150, %v1053
  %v1172 = vmul.f32 %v1131, %v1151
  %v1173 = vadd.f32 %v1171, %v1172
  %v1174 = vtanh.pop %v1173
  %v1175 = vmul.f32 %v1170, %v1174
  %v1176 = vpack.c.bf16 %v1175, %v1175
  %1177 = vmatpush.bf16.msra.mxu0 %v541
  %1178 = vmatpush.bf16.msra.mxu0 %v537
  %1179 = vmatpush.bf16.msra.mxu0 %v533
  %1180 = vmatpush.bf16.msra.mxu0 %v529
  %1181 = vmatpush.bf16.msra.mxu0 %v525
  %1182 = vmatpush.bf16.msra.mxu0 %v521
  %1183 = vmatpush.bf16.msra.mxu0 %v517
  %1184 = vmatpush.bf16.msra.mxu0 %v513
  %1185 = vmatmul.bf16.gmra.mxu0 %v1176
  %v1186 = vpop.f32.mrf.mxu0
  %v1187 = vadd.f32 0.0, %v1186
  %v1188 = vpop.f32.mrf.mxu0
  %1189 = vdwg.mxu0
  %1190 = vmatpush.bf16.msra.mxu0 %v542
  %1191 = vmatpush.bf16.msra.mxu0 %v538
  %1192 = vmatpush.bf16.msra.mxu0 %v534
  %1193 = vmatpush.bf16.msra.mxu0 %v530
  %1194 = vmatpush.bf16.msra.mxu0 %v526
  %1195 = vmatpush.bf16.msra.mxu0 %v522
  %1196 = vmatpush.bf16.msra.mxu0 %v518
  %1197 = vmatpush.bf16.msra.mxu0 %v514
  %1198 = vmatmul.bf16.gmra.mxu0 %v1176
  %v1199 = vpop.f32.mrf.mxu0
  %v1200 = vadd.f32 0.0, %v1199
  %v1201 = vpop.f32.mrf.mxu0
  %1202 = vdwg.mxu0
  %1203 = vmatpush.bf16.msra.mxu0 %v543
  %1204 = vmatpush.bf16.msra.mxu0 %v539
  %1205 = vmatpush.bf16.msra.mxu0 %v535
  %1206 = vmatpush.bf16.msra.mxu0 %v531
  %1207 = vmatpush.bf16.msra.mxu0 %v527
  %1208 = vmatpush.bf16.msra.mxu0 %v523
  %1209 = vmatpush.bf16.msra.mxu0 %v519
  %1210 = vmatpush.bf16.msra.mxu0 %v515
  %1211 = vmatmul.bf16.gmra.mxu0 %v1176
  %v1212 = vpop.f32.mrf.mxu0
  %v1213 = vadd.f32 0.0, %v1212
  %v1214 = vpop.f32.mrf.mxu0
  %1215 = vdwg.mxu0
  %1216 = vmatpush.bf16.msra.mxu0 %v544
  %1217 = vmatpush.bf16.msra.mxu0 %v540
  %1218 = vmatpush.bf16.msra.mxu0 %v536
  %1219 = vmatpush.bf16.msra.mxu0 %v532
  %1220 = vmatpush.bf16.msra.mxu0 %v528
  %1221 = vmatpush.bf16.msra.mxu0 %v524
  %1222 = vmatpush.bf16.msra.mxu0 %v520
  %1223 = vmatpush.bf16.msra.mxu0 %v516
  %1224 = vmatmul.bf16.gmra.mxu0 %v1176
  %v1225 = vpop.f32.mrf.mxu0
  %v1226 = vadd.f32 0.0, %v1225
  %v1227 = vpop.f32.mrf.mxu0
  %1228 = vdwg.mxu0
  %v1229 = vadd.f32 %v288, %v1187
  %v1230 = vadd.f32 %v317, %v1200
  %v1231 = vadd.f32 %v346, %v1213
  %v1232 = vadd.f32 %v375, %v1226
  %v1233 = vxor.u32 %v1229, 2147483648
  %v1234 = vmul.f32 %v1233, 1.442695
  %v1235 = vpow.pop %v1234
  %v1236 = vadd.f32 %v1235, 1.0
  %v1237 = vrcp.pop %v1236
  %v1238 = vmul.f32 %v1236, %v1237
  %v1239 = vsub.f32 1.0, %v1238
  %v1240 = vmul.f32 %v1237, %v1239
  %v1241 = vadd.f32 %v1237, %v1240
  %vm1242 = vweird.f32 %v1236
  %vm1243 = vweird.f32 %v1237
  %vm1244 = vmor %vm1242, %vm1243
  %v1245 = vsel %vm1244, %v1237, %v1241
  %v1246 = vand.u32 2147483647, %v1236
  %vm1247 = vcmp.eq.f32.partialorder %v1246, 8.507059e+37
  %v1248 = vand.u32 %v1236, 2147483648
  %v1249 = vor.u32 1.1754944e-38, %v1248
  %v1250 = vsel %vm1247, %v1249, %v1245
  %v1251 = vmul.f32 1.0, %v1250
  %v1252 = vxor.u32 %v1230, 2147483648
  %v1253 = vmul.f32 %v1252, 1.442695
  %v1254 = vpow.pop %v1253
  %v1255 = vadd.f32 %v1254, 1.0
  %v1256 = vrcp.pop %v1255
  %v1257 = vmul.f32 %v1255, %v1256
  %v1258 = vsub.f32 1.0, %v1257
  %v1259 = vmul.f32 %v1256, %v1258
  %v1260 = vadd.f32 %v1256, %v1259
  %vm1261 = vweird.f32 %v1255
  %vm1262 = vweird.f32 %v1256
  %vm1263 = vmor %vm1261, %vm1262
  %v1264 = vsel %vm1263, %v1256, %v1260
  %v1265 = vand.u32 2147483647, %v1255
  %vm1266 = vcmp.eq.f32.partialorder %v1265, 8.507059e+37
  %v1267 = vand.u32 %v1255, 2147483648
  %v1268 = vor.u32 1.1754944e-38, %v1267
  %v1269 = vsel %vm1266, %v1268, %v1264
  %v1270 = vmul.f32 1.0, %v1269
  %v1271 = vtanh.pop %v1231
  %v1272 = vxor.u32 %v1232, 2147483648
  %v1273 = vmul.f32 %v1272, 1.442695
  %v1274 = vpow.pop %v1273
  %v1275 = vadd.f32 %v1274, 1.0
  %v1276 = vrcp.pop %v1275
  %v1277 = vmul.f32 %v1275, %v1276
  %v1278 = vsub.f32 1.0, %v1277
  %v1279 = vmul.f32 %v1276, %v1278
  %v1280 = vadd.f32 %v1276, %v1279
  %vm1281 = vweird.f32 %v1275
  %vm1282 = vweird.f32 %v1276
  %vm1283 = vmor %vm1281, %vm1282
  %v1284 = vsel %vm1283, %v1276, %v1280
  %v1285 = vand.u32 2147483647, %v1275
  %vm1286 = vcmp.eq.f32.partialorder %v1285, 8.507059e+37
  %v1287 = vand.u32 %v1275, 2147483648
  %v1288 = vor.u32 1.1754944e-38, %v1287
  %v1289 = vsel %vm1286, %v1288, %v1284
  %v1290 = vmul.f32 1.0, %v1289
  %v1291 = vmul.f32 %v1270, %v1173
  %v1292 = vmul.f32 %v1251, %v1271
  %v1293 = vadd.f32 %v1291, %v1292
  %v1294 = vtanh.pop %v1293
  %v1295 = vmul.f32 %v1290, %v1294
  %v1296 = vpack.c.bf16 %v1295, %v1295
  %1297 = vmatpush.bf16.msra.mxu0 %v541
  %1298 = vmatpush.bf16.msra.mxu0 %v537
  %1299 = vmatpush.bf16.msra.mxu0 %v533
  %1300 = vmatpush.bf16.msra.mxu0 %v529
  %1301 = vmatpush.bf16.msra.mxu0 %v525
  %1302 = vmatpush.bf16.msra.mxu0 %v521
  %1303 = vmatpush.bf16.msra.mxu0 %v517
  %1304 = vmatpush.bf16.msra.mxu0 %v513
  %1305 = vmatmul.bf16.gmra.mxu0 %v1296
  %v1306 = vpop.f32.mrf.mxu0
  %v1307 = vadd.f32 0.0, %v1306
  %v1308 = vpop.f32.mrf.mxu0
  %1309 = vdwg.mxu0
  %1310 = vmatpush.bf16.msra.mxu0 %v542
  %1311 = vmatpush.bf16.msra.mxu0 %v538
  %1312 = vmatpush.bf16.msra.mxu0 %v534
  %1313 = vmatpush.bf16.msra.mxu0 %v530
  %1314 = vmatpush.bf16.msra.mxu0 %v526
  %1315 = vmatpush.bf16.msra.mxu0 %v522
  %1316 = vmatpush.bf16.msra.mxu0 %v518
  %1317 = vmatpush.bf16.msra.mxu0 %v514
  %1318 = vmatmul.bf16.gmra.mxu0 %v1296
  %v1319 = vpop.f32.mrf.mxu0
  %v1320 = vadd.f32 0.0, %v1319
  %v1321 = vpop.f32.mrf.mxu0
  %1322 = vdwg.mxu0
  %1323 = vmatpush.bf16.msra.mxu0 %v543
  %1324 = vmatpush.bf16.msra.mxu0 %v539
  %1325 = vmatpush.bf16.msra.mxu0 %v535
  %1326 = vmatpush.bf16.msra.mxu0 %v531
  %1327 = vmatpush.bf16.msra.mxu0 %v527
  %1328 = vmatpush.bf16.msra.mxu0 %v523
  %1329 = vmatpush.bf16.msra.mxu0 %v519
  %1330 = vmatpush.bf16.msra.mxu0 %v515
  %1331 = vmatmul.bf16.gmra.mxu0 %v1296
  %v1332 = vpop.f32.mrf.mxu0
  %v1333 = vadd.f32 0.0, %v1332
  %v1334 = vpop.f32.mrf.mxu0
  %1335 = vdwg.mxu0
  %1336 = vmatpush.bf16.msra.mxu0 %v544
  %1337 = vmatpush.bf16.msra.mxu0 %v540
  %1338 = vmatpush.bf16.msra.mxu0 %v536
  %1339 = vmatpush.bf16.msra.mxu0 %v532
  %1340 = vmatpush.bf16.msra.mxu0 %v528
  %1341 = vmatpush.bf16.msra.mxu0 %v524
  %1342 = vmatpush.bf16.msra.mxu0 %v520
  %1343 = vmatpush.bf16.msra.mxu0 %v516
  %1344 = vmatmul.bf16.gmra.mxu0 %v1296
  %v1345 = vpop.f32.mrf.mxu0
  %v1346 = vadd.f32 0.0, %v1345
  %v1347 = vpop.f32.mrf.mxu0
  %1348 = vdwg.mxu0
  %v1349 = vadd.f32 %v291, %v1307
  %v1350 = vadd.f32 %v320, %v1320
  %v1351 = vadd.f32 %v349, %v1333
  %v1352 = vadd.f32 %v378, %v1346
  %v1353 = vxor.u32 %v1349, 2147483648
  %v1354 = vmul.f32 %v1353, 1.442695
  %v1355 = vpow.pop %v1354
  %v1356 = vadd.f32 %v1355, 1.0
  %v1357 = vrcp.pop %v1356
  %v1358 = vmul.f32 %v1356, %v1357
  %v1359 = vsub.f32 1.0, %v1358
  %v1360 = vmul.f32 %v1357, %v1359
  %v1361 = vadd.f32 %v1357, %v1360
  %vm1362 = vweird.f32 %v1356
  %vm1363 = vweird.f32 %v1357
  %vm1364 = vmor %vm1362, %vm1363
  %v1365 = vsel %vm1364, %v1357, %v1361
  %v1366 = vand.u32 2147483647, %v1356
  %vm1367 = vcmp.eq.f32.partialorder %v1366, 8.507059e+37
  %v1368 = vand.u32 %v1356, 2147483648
  %v1369 = vor.u32 1.1754944e-38, %v1368
  %v1370 = vsel %vm1367, %v1369, %v1365
  %v1371 = vmul.f32 1.0, %v1370
  %v1372 = vxor.u32 %v1350, 2147483648
  %v1373 = vmul.f32 %v1372, 1.442695
  %v1374 = vpow.pop %v1373
  %v1375 = vadd.f32 %v1374, 1.0
  %v1376 = vrcp.pop %v1375
  %v1377 = vmul.f32 %v1375, %v1376
  %v1378 = vsub.f32 1.0, %v1377
  %v1379 = vmul.f32 %v1376, %v1378
  %v1380 = vadd.f32 %v1376, %v1379
  %vm1381 = vweird.f32 %v1375
  %vm1382 = vweird.f32 %v1376
  %vm1383 = vmor %vm1381, %vm1382
  %v1384 = vsel %vm1383, %v1376, %v1380
  %v1385 = vand.u32 2147483647, %v1375
  %vm1386 = vcmp.eq.f32.partialorder %v1385, 8.507059e+37
  %v1387 = vand.u32 %v1375, 2147483648
  %v1388 = vor.u32 1.1754944e-38, %v1387
  %v1389 = vsel %vm1386, %v1388, %v1384
  %v1390 = vmul.f32 1.0, %v1389
  %v1391 = vtanh.pop %v1351
  %v1392 = vxor.u32 %v1352, 2147483648
  %v1393 = vmul.f32 %v1392, 1.442695
  %v1394 = vpow.pop %v1393
  %v1395 = vadd.f32 %v1394, 1.0
  %v1396 = vrcp.pop %v1395
  %v1397 = vmul.f32 %v1395, %v1396
  %v1398 = vsub.f32 1.0, %v1397
  %v1399 = vmul.f32 %v1396, %v1398
  %v1400 = vadd.f32 %v1396, %v1399
  %vm1401 = vweird.f32 %v1395
  %vm1402 = vweird.f32 %v1396
  %vm1403 = vmor %vm1401, %vm1402
  %v1404 = vsel %vm1403, %v1396, %v1400
  %v1405 = vand.u32 2147483647, %v1395
  %vm1406 = vcmp.eq.f32.partialorder %v1405, 8.507059e+37
  %v1407 = vand.u32 %v1395, 2147483648
  %v1408 = vor.u32 1.1754944e-38, %v1407
  %v1409 = vsel %vm1406, %v1408, %v1404
  %v1410 = vmul.f32 1.0, %v1409
  %v1411 = vmul.f32 %v1390, %v1293
  %v1412 = vmul.f32 %v1371, %v1391
  %v1413 = vadd.f32 %v1411, %v1412
  %v1414 = vtanh.pop %v1413
  %v1415 = vmul.f32 %v1410, %v1414
  %v1416 = vpack.c.bf16 %v1415, %v1415
  %1417 = vmatpush.bf16.msra.mxu0 %v541
  %1418 = vmatpush.bf16.msra.mxu0 %v537
  %1419 = vmatpush.bf16.msra.mxu0 %v533
  %1420 = vmatpush.bf16.msra.mxu0 %v529
  %1421 = vmatpush.bf16.msra.mxu0 %v525
  %1422 = vmatpush.bf16.msra.mxu0 %v521
  %1423 = vmatpush.bf16.msra.mxu0 %v517
  %1424 = vmatpush.bf16.msra.mxu0 %v513
  %1425 = vmatmul.bf16.gmra.mxu0 %v1416
  %v1426 = vpop.f32.mrf.mxu0
  %v1427 = vadd.f32 0.0, %v1426
  %v1428 = vpop.f32.mrf.mxu0
  %1429 = vdwg.mxu0
  %1430 = vmatpush.bf16.msra.mxu0 %v542
  %1431 = vmatpush.bf16.msra.mxu0 %v538
  %1432 = vmatpush.bf16.msra.mxu0 %v534
  %1433 = vmatpush.bf16.msra.mxu0 %v530
  %1434 = vmatpush.bf16.msra.mxu0 %v526
  %1435 = vmatpush.bf16.msra.mxu0 %v522
  %1436 = vmatpush.bf16.msra.mxu0 %v518
  %1437 = vmatpush.bf16.msra.mxu0 %v514
  %1438 = vmatmul.bf16.gmra.mxu0 %v1416
  %v1439 = vpop.f32.mrf.mxu0
  %v1440 = vadd.f32 0.0, %v1439
  %v1441 = vpop.f32.mrf.mxu0
  %1442 = vdwg.mxu0
  %1443 = vmatpush.bf16.msra.mxu0 %v543
  %1444 = vmatpush.bf16.msra.mxu0 %v539
  %1445 = vmatpush.bf16.msra.mxu0 %v535
  %1446 = vmatpush.bf16.msra.mxu0 %v531
  %1447 = vmatpush.bf16.msra.mxu0 %v527
  %1448 = vmatpush.bf16.msra.mxu0 %v523
  %1449 = vmatpush.bf16.msra.mxu0 %v519
  %1450 = vmatpush.bf16.msra.mxu0 %v515
  %1451 = vmatmul.bf16.gmra.mxu0 %v1416
  %v1452 = vpop.f32.mrf.mxu0
  %v1453 = vadd.f32 0.0, %v1452
  %v1454 = vpop.f32.mrf.mxu0
  %1455 = vdwg.mxu0
  %1456 = vmatpush.bf16.msra.mxu0 %v544
  %1457 = vmatpush.bf16.msra.mxu0 %v540
  %1458 = vmatpush.bf16.msra.mxu0 %v536
  %1459 = vmatpush.bf16.msra.mxu0 %v532
  %1460 = vmatpush.bf16.msra.mxu0 %v528
  %1461 = vmatpush.bf16.msra.mxu0 %v524
  %1462 = vmatpush.bf16.msra.mxu0 %v520
  %1463 = vmatpush.bf16.msra.mxu0 %v516
  %1464 = vmatmul.bf16.gmra.mxu0 %v1416
  %v1465 = vpop.f32.mrf.mxu0
  %v1466 = vadd.f32 0.0, %v1465
  %v1467 = vpop.f32.mrf.mxu0
  %1468 = vdwg.mxu0
  %v1469 = vadd.f32 %v293, %v1427
  %v1470 = vadd.f32 %v322, %v1440
  %v1471 = vadd.f32 %v351, %v1453
  %v1472 = vadd.f32 %v380, %v1466
  %v1473 = vxor.u32 %v1469, 2147483648
  %v1474 = vmul.f32 %v1473, 1.442695
  %v1475 = vpow.pop %v1474
  %v1476 = vadd.f32 %v1475, 1.0
  %v1477 = vrcp.pop %v1476
  %v1478 = vmul.f32 %v1476, %v1477
  %v1479 = vsub.f32 1.0, %v1478
  %v1480 = vmul.f32 %v1477, %v1479
  %v1481 = vadd.f32 %v1477, %v1480
  %vm1482 = vweird.f32 %v1476
  %vm1483 = vweird.f32 %v1477
  %vm1484 = vmor %vm1482, %vm1483
  %v1485 = vsel %vm1484, %v1477, %v1481
  %v1486 = vand.u32 2147483647, %v1476
  %vm1487 = vcmp.eq.f32.partialorder %v1486, 8.507059e+37
  %v1488 = vand.u32 %v1476, 2147483648
  %v1489 = vor.u32 1.1754944e-38, %v1488
  %v1490 = vsel %vm1487, %v1489, %v1485
  %v1491 = vmul.f32 1.0, %v1490
  %v1492 = vxor.u32 %v1470, 2147483648
  %v1493 = vmul.f32 %v1492, 1.442695
  %v1494 = vpow.pop %v1493
  %v1495 = vadd.f32 %v1494, 1.0
  %v1496 = vrcp.pop %v1495
  %v1497 = vmul.f32 %v1495, %v1496
  %v1498 = vsub.f32 1.0, %v1497
  %v1499 = vmul.f32 %v1496, %v1498
  %v1500 = vadd.f32 %v1496, %v1499
  %vm1501 = vweird.f32 %v1495
  %vm1502 = vweird.f32 %v1496
  %vm1503 = vmor %vm1501, %vm1502
  %v1504 = vsel %vm1503, %v1496, %v1500
  %v1505 = vand.u32 2147483647, %v1495
  %vm1506 = vcmp.eq.f32.partialorder %v1505, 8.507059e+37
  %v1507 = vand.u32 %v1495, 2147483648
  %v1508 = vor.u32 1.1754944e-38, %v1507
  %v1509 = vsel %vm1506, %v1508, %v1504
  %v1510 = vmul.f32 1.0, %v1509
  %v1511 = vtanh.pop %v1471
  %v1512 = vxor.u32 %v1472, 2147483648
  %v1513 = vmul.f32 %v1512, 1.442695
  %v1514 = vpow.pop %v1513
  %v1515 = vadd.f32 %v1514, 1.0
  %v1516 = vrcp.pop %v1515
  %v1517 = vmul.f32 %v1515, %v1516
  %v1518 = vsub.f32 1.0, %v1517
  %v1519 = vmul.f32 %v1516, %v1518
  %v1520 = vadd.f32 %v1516, %v1519
  %vm1521 = vweird.f32 %v1515
  %vm1522 = vweird.f32 %v1516
  %vm1523 = vmor %vm1521, %vm1522
  %v1524 = vsel %vm1523, %v1516, %v1520
  %v1525 = vand.u32 2147483647, %v1515
  %vm1526 = vcmp.eq.f32.partialorder %v1525, 8.507059e+37
  %v1527 = vand.u32 %v1515, 2147483648
  %v1528 = vor.u32 1.1754944e-38, %v1527
  %v1529 = vsel %vm1526, %v1528, %v1524
  %v1530 = vmul.f32 1.0, %v1529
  %v1531 = vmul.f32 %v1510, %v1413
  %v1532 = vmul.f32 %v1491, %v1511
  %v1533 = vadd.f32 %v1531, %v1532
  %v1534 = vtanh.pop %v1533
  %v1535 = vmul.f32 %v1530, %v1534
  %1536 = vst [vmem:[%s9] sm:$0xff] %v1535
  %1537 = vst [vmem:[%s10] sm:$0xff] %v1533
  %v1538 = vpack.c.bf16 %v1535, %v1535
  %v1539 = vld [vmem:[%s6] sm:$0xf]
  %v1540 = vld [vmem:[%s6 + $0x4] sm:$0xf]
  %v1541 = vld [vmem:[%s6 + $0x8] sm:$0xf]
  %v1542 = vld [vmem:[%s6 + $0xc] sm:$0xf]
  %v1543 = vld [vmem:[%s6 + $0x10] sm:$0xf]
  %v1544 = vld [vmem:[%s6 + $0x14] sm:$0xf]
  %v1545 = vld [vmem:[%s6 + $0x18] sm:$0xf]
  %v1546 = vld [vmem:[%s6 + $0x1c] sm:$0xf]
  %v1547 = vld [vmem:[%s6 + $0x20] sm:$0xf]
  %v1548 = vld [vmem:[%s6 + $0x24] sm:$0xf]
  %v1549 = vld [vmem:[%s6 + $0x28] sm:$0xf]
  %v1550 = vld [vmem:[%s6 + $0x2c] sm:$0xf]
  %v1551 = vld [vmem:[%s6 + $0x30] sm:$0xf]
  %v1552 = vld [vmem:[%s6 + $0x34] sm:$0xf]
  %v1553 = vld [vmem:[%s6 + $0x38] sm:$0xf]
  %v1554 = vld [vmem:[%s6 + $0x3c] sm:$0xf]
  %v1555 = vld [vmem:[%s7] sm:$0x1]
  %v1557 = vperm.slane %v1555, 0
  %v1575 = vunpack.c.l.b16 %v1539
  %v1576 = vunpack.c.l.b16 %v1540
  %v1577 = vunpack.c.l.b16 %v1541
  %v1578 = vunpack.c.l.b16 %v1542
  %v1579 = vunpack.c.l.b16 %v1543
  %v1580 = vunpack.c.l.b16 %v1544
  %v1581 = vunpack.c.l.b16 %v1545
  %v1582 = vunpack.c.l.b16 %v1546
  %v1583 = vunpack.c.l.b16 %v1547
  %v1584 = vunpack.c.l.b16 %v1548
  %v1585 = vunpack.c.l.b16 %v1549
  %v1586 = vunpack.c.l.b16 %v1550
  %v1587 = vunpack.c.l.b16 %v1551
  %v1588 = vunpack.c.l.b16 %v1552
  %v1589 = vunpack.c.l.b16 %v1553
  %v1590 = vunpack.c.l.b16 %v1554
  %v1591 = vpack.c.b16 %v1576, %v1575
  %v1592 = vpack.c.b16 %v1578, %v1577
  %v1593 = vpack.c.b16 %v1580, %v1579
  %v1594 = vpack.c.b16 %v1582, %v1581
  %v1595 = vpack.c.b16 %v1584, %v1583
  %v1596 = vpack.c.b16 %v1586, %v1585
  %v1597 = vpack.c.b16 %v1588, %v1587
  %v1598 = vpack.c.b16 %v1590, %v1589
  %1607 = vmatpush.bf16.msra.mxu0 %v1598
  %1608 = vmatpush.bf16.msra.mxu0 %v1597
  %1609 = vmatpush.bf16.msra.mxu0 %v1596
  %1610 = vmatpush.bf16.msra.mxu0 %v1595
  %1611 = vmatpush.bf16.msra.mxu0 %v1594
  %1612 = vmatpush.bf16.msra.mxu0 %v1593
  %1613 = vmatpush.bf16.msra.mxu0 %v1592
  %1614 = vmatpush.bf16.msra.mxu0 %v1591
  %1615 = vmatmul.bf16.gmra.mxu0 %v1538
  %v1616 = vpop.f32.mrf.mxu0
  %v1617 = vadd.f32 %v1557, %v1616
  %v1618 = vpop.f32.mrf.mxu0
  %1619 = vdwg.mxu0
  %1620 = vst [vmem:[%s8] sm:$0xff] %v1617
  // Predicated region
  $region34: #{lstm_poetry_forward.1} parent=0 // pred_check
    _
  $region35: #{lstm_poetry_forward.1} parent=0 // pred_check_branch
    %1622 = sbr.rel (0) target = $region37
  $region36: #{lstm_poetry_forward.1} parent=0 // pred_region
    _
  $region37: #{lstm_poetry_forward.1} parent=0 // pred_fallthru
    _
  // Predicated region
  $region38: #{lstm_poetry_forward.1} parent=0 // pred_check
    _
  $region39: #{lstm_poetry_forward.1} parent=0 // pred_check_branch
    %1624 = sbr.rel (0) target = $region41
  $region40: #{lstm_poetry_forward.1} parent=0 // pred_region
    _
  $region41: #{lstm_poetry_forward.1} parent=0 // pred_fallthru
    _
  // Predicated region
  $region42: #{lstm_poetry_forward.1} parent=0 // pred_check
    _
  $region43: #{lstm_poetry_forward.1} parent=0 // pred_check_branch
    %1626 = sbr.rel (0) target = $region45
  $region44: #{lstm_poetry_forward.1} parent=0 // pred_region
    _
  $region45: #{lstm_poetry_forward.1} parent=0 // pred_fallthru
    _
  // Predicated region
  $region46: #{lstm_poetry_forward.1} parent=0 // pred_check
    _
  $region47: #{lstm_poetry_forward.1} parent=0 // pred_check_branch
    %1628 = sbr.rel (0) target = $region49
  $region48: #{lstm_poetry_forward.1} parent=0 // pred_region
    _
  $region49: #{lstm_poetry_forward.1} parent=0 // pred_fallthru
    _
  // Predicated region
  $region50: #{lstm_poetry_forward.1} parent=0 // pred_check
    _
  $region51: #{lstm_poetry_forward.1} parent=0 // pred_check_branch
    %1630 = sbr.rel (0) target = $region53
  $region52: #{lstm_poetry_forward.1} parent=0 // pred_region
    _
  $region53: #{lstm_poetry_forward.1} parent=0 // pred_fallthru
    _
  // Predicated region
  $region54: #{lstm_poetry_forward.1} parent=0 // pred_check
    _
  $region55: #{lstm_poetry_forward.1} parent=0 // pred_check_branch
    %1632 = sbr.rel (0) target = $region57
  $region56: #{lstm_poetry_forward.1} parent=0 // pred_region
    _
  $region57: #{lstm_poetry_forward.1} parent=0 // pred_fallthru
    _

</llo_original>
